<compile_context>
chip_gen: v6e
topology: v6e:2x2x1
jax: 0.10.0
libtpu: 0.0.40
codegen_flags: <defaults>
</compile_context>

<pallas_src>
import functools

import jax
import jax.numpy as jnp
from jax import lax
from jax.experimental import pallas as pl
from jax.experimental.pallas import tpu as pltpu


def _conv_stats_kernel(w_ref, x_ref, conv_ref, psum_ref, pm2_ref,
                       *, kh, kw, stride, Ho, Wo):
    """Pass 1 (one image per grid step): implicit-GEMM conv on the MXU plus
    per-image, per-channel (sum, centered sum-of-squares) partial statistics."""
    s = stride
    M = Ho * Wo
    cout = w_ref.shape[1]
    prec = lax.Precision.HIGHEST if w_ref.dtype == jnp.float32 else None
    acc = jnp.zeros((cout, M), jnp.float32)
    for ki in range(kh):                       # static unroll: kh*kw shifted matmuls
        for kj in range(kw):
            ph = kj * s + (ki % s)             # (col-tap, row-phase) slab of x
            off = (ki // s) * Wo               # contiguous lane window inside it
            xs = x_ref[ph, :, off:off + M]                       # [Cin, M]
            acc = acc + jnp.dot(w_ref[ki * kw + kj], xs,
                                preferred_element_type=jnp.float32, precision=prec)
    conv_ref[...] = acc.astype(conv_ref.dtype)                   # lane-dense [Cout, M]
    ssum = jnp.sum(acc, axis=1, keepdims=True)                   # [Cout, 1]
    psum_ref[...] = ssum
    mean_t = ssum * (1.0 / M)
    pm2_ref[...] = jnp.sum((acc - mean_t) ** 2, axis=1, keepdims=True)


def _bn_apply_kernel(scale_ref, shift_ref, conv_ref, o_ref):
    """Pass 2: pre-folded BatchNorm affine -- one FMA per element, NCHW-direct."""
    o_ref[...] = (conv_ref[...].astype(jnp.float32) * scale_ref[...]
                  + shift_ref[...]).astype(o_ref.dtype)


def conv_block_forward(x, w, b, gamma, beta, *, stride=1, padding=0, eps=1e-5,
                       compute_dtype=jnp.bfloat16):
    """x: [N, Cin, H, W] (NCHW), w: [Cout, Cin, kh, kw] (OIHW) -> [N, Cout, Ho, Wo].

    Implements bn(conv(x)) with BatchNorm2d in training mode (biased batch stats).
    """
    N, Cin, H, W = x.shape
    Cout, _, kh, kw = w.shape
    s = int(stride)
    p = int(padding)
    Ho = (H + 2 * p - kh) // s + 1
    Wo = (W + 2 * p - kw) // s + 1
    M = Ho * Wo
    Ha = Ho + (kh - 1) // s           # rows kept per row-phase slab (max over phases)
    L = Ha * Wo                       # lane length of each slab

    # Conv bias is algebraically cancelled by the training-mode BN mean subtraction.
    del b

    cdtype = jnp.dtype(compute_dtype)
    inter_dtype = jnp.float32 if cdtype == jnp.dtype(jnp.float32) else jnp.bfloat16

    # ---- phase-decomposed column slabs (kw*s-fold, not kh*kw-fold, duplication) ----
    # x_cols[kj*s + rh, n, ci, a*Wo + wo] = x_pad[n, ci, rh + a*s, kj + wo*s]
    # Tap (ki, kj) reads the contiguous window
    #   x_cols[kj*s + ki%s, n, :, (ki//s)*Wo : (ki//s)*Wo + Ho*Wo].
    x_q = x.astype(cdtype)
    x_pad = jnp.pad(x_q, ((0, 0), (0, 0), (p, p), (p, p)))
    slabs = []
    for kj in range(kw):
        for rh in range(s):
            rows = Ho + (kh - 1 - rh) // s
            sl = x_pad[:, :, rh:rh + s * rows:s, kj:kj + s * Wo:s]   # [N, Cin, rows, Wo]
            if rows < Ha:
                sl = jnp.pad(sl, ((0, 0), (0, 0), (0, Ha - rows), (0, 0)))
            slabs.append(sl.reshape(N, Cin, L))
    x_cols = jnp.stack(slabs, axis=0)                                # [kw*s, N, Cin, L]
    w_taps = jnp.transpose(w, (2, 3, 0, 1)).reshape(kh * kw, Cout, Cin).astype(cdtype)

    cparams = pltpu.CompilerParams(dimension_semantics=("parallel",))

    # ---- pass 1: conv (MXU implicit GEMM) + per-image per-channel partial stats ----
    kern1 = functools.partial(_conv_stats_kernel, kh=kh, kw=kw, stride=s, Ho=Ho, Wo=Wo)
    conv_i, psum, pm2 = pl.pallas_call(
        kern1,
        out_shape=(
            jax.ShapeDtypeStruct((N, Cout, M), inter_dtype),
            jax.ShapeDtypeStruct((N, Cout, 1), jnp.float32),
            jax.ShapeDtypeStruct((N, Cout, 1), jnp.float32),
        ),
        grid=(N,),
        in_specs=[
            pl.BlockSpec((kh * kw, Cout, Cin), lambda n: (0, 0, 0)),      # resident taps
            pl.BlockSpec((kw * s, None, Cin, L), lambda n: (0, n, 0, 0)),  # one image
        ],
        out_specs=(
            pl.BlockSpec((None, Cout, M), lambda n: (n, 0, 0)),
            pl.BlockSpec((None, Cout, 1), lambda n: (n, 0, 0)),
            pl.BlockSpec((None, Cout, 1), lambda n: (n, 0, 0)),
        ),
        compiler_params=cparams,
    )(w_taps, x_cols)

    # ---- O(N*Cout) glue: Chan/Welford combine of per-image partials, fold BN ----
    sums = psum[:, :, 0]                                   # [N, Cout]
    m2s = pm2[:, :, 0]                                     # [N, Cout]
    mean_img = sums / M
    mean = jnp.sum(sums, axis=0) / (N * M)                 # [Cout]
    m2 = jnp.sum(m2s, axis=0) + M * jnp.sum((mean_img - mean[None, :]) ** 2, axis=0)
    var = m2 / (N * M)                                     # biased batch variance
    inv = lax.rsqrt(var + eps)
    g32 = gamma.astype(jnp.float32)
    scale = (g32 * inv).reshape(Cout, 1)
    shift = (beta.astype(jnp.float32) - mean * g32 * inv).reshape(Cout, 1)

    # ---- pass 2: apply the folded affine, NCHW-direct lane-dense stores ----
    out_flat = pl.pallas_call(
        _bn_apply_kernel,
        out_shape=jax.ShapeDtypeStruct((N, Cout, M), x.dtype),
        grid=(N,),
        in_specs=[
            pl.BlockSpec((Cout, 1), lambda n: (0, 0)),
            pl.BlockSpec((Cout, 1), lambda n: (0, 0)),
            pl.BlockSpec((None, Cout, M), lambda n: (n, 0, 0)),
        ],
        out_specs=pl.BlockSpec((None, Cout, M), lambda n: (n, 0, 0)),
        compiler_params=cparams,
    )(scale, shift, conv_i)

    # Trailing-dim split only: no data movement (the old full transpose is gone).
    return out_flat.reshape(N, Cout, Ho, Wo)


def _reference(x, w, b, gamma, beta, *, stride, padding, eps):
    conv = lax.conv_general_dilated(
        x, w, window_strides=(stride, stride),
        padding=[(padding, padding), (padding, padding)],
        dimension_numbers=("NCHW", "OIHW", "NCHW"),
        precision=lax.Precision.HIGHEST,
    ) + b.reshape(1, -1, 1, 1)
    mean = jnp.mean(conv, axis=(0, 2, 3), keepdims=True)
    var = jnp.mean((conv - mean) ** 2, axis=(0, 2, 3), keepdims=True)
    return (conv - mean) * lax.rsqrt(var + eps) * gamma.reshape(1, -1, 1, 1) + \
        beta.reshape(1, -1, 1, 1)


if __name__ == "__main__":
    key = jax.random.PRNGKey(0)
    k_x, k_w, k_b, k_x2, k_w2, k_b2 = jax.random.split(key, 6)

    # --- config 1: ConvBlock(4, 8, 3, s=1, p=1) on x[2, 4, 16, 16] ---
    N, Cin, H, W = 2, 4, 16, 16
    Cout, ksz, stride, pad = 8, 3, 1, 1
    x = jax.random.normal(k_x, (N, Cin, H, W), dtype=jnp.float32)
    w = 0.1 * jax.random.normal(k_w, (Cout, Cin, ksz, ksz), dtype=jnp.float32)
    b = 0.1 * jax.random.normal(k_b, (Cout,), dtype=jnp.float32)
    gamma = jnp.ones((Cout,), dtype=jnp.float32)   # BatchNorm2d default weight
    beta = jnp.zeros((Cout,), dtype=jnp.float32)   # BatchNorm2d default bias

    ref1 = _reference(x, w, b, gamma, beta, stride=stride, padding=pad, eps=1e-5)

    fwd_bf16 = jax.jit(functools.partial(conv_block_forward, stride=stride, padding=pad))
    out_bf16 = jax.block_until_ready(fwd_bf16(x, w, b, gamma, beta))
    assert out_bf16.shape == (N, Cout, H, W), out_bf16.shape
    err_b = float(jnp.max(jnp.abs(out_bf16 - ref1)))
    assert jnp.allclose(out_bf16, ref1, rtol=5e-2, atol=5e-2), err_b

    fwd_f32 = jax.jit(functools.partial(conv_block_forward, stride=stride, padding=pad,
                                        compute_dtype=jnp.float32))
    out_f32 = jax.block_until_ready(fwd_f32(x, w, b, gamma, beta))
    err_f = float(jnp.max(jnp.abs(out_f32 - ref1)))
    assert jnp.allclose(out_f32, ref1, rtol=1e-3, atol=1e-3), err_f

    # --- config 2: ConvBlock(3, 16, 3, s=2, p=1) on x[2, 3, 11, 11] ---
    # exercises stride > 1 (row/col phase decomposition) and odd spatial sizes.
    N2, Cin2, H2, W2 = 2, 3, 11, 11
    Cout2, ksz2, stride2, pad2 = 16, 3, 2, 1
    x2 = jax.random.normal(k_x2, (N2, Cin2, H2, W2), dtype=jnp.float32)
    w2 = 0.1 * jax.random.normal(k_w2, (Cout2, Cin2, ksz2, ksz2), dtype=jnp.float32)
    b2 = 0.1 * jax.random.normal(k_b2, (Cout2,), dtype=jnp.float32)
    g2 = jnp.ones((Cout2,), dtype=jnp.float32)
    be2 = jnp.zeros((Cout2,), dtype=jnp.float32)

    Ho2 = (H2 + 2 * pad2 - ksz2) // stride2 + 1
    ref2 = _reference(x2, w2, b2, g2, be2, stride=stride2, padding=pad2, eps=1e-5)

    fwd2_bf16 = jax.jit(functools.partial(conv_block_forward, stride=stride2, padding=pad2))
    out2_bf16 = jax.block_until_ready(fwd2_bf16(x2, w2, b2, g2, be2))
    assert out2_bf16.shape == (N2, Cout2, Ho2, Ho2), out2_bf16.shape
    err2b = float(jnp.max(jnp.abs(out2_bf16 - ref2)))
    assert jnp.allclose(out2_bf16, ref2, rtol=5e-2, atol=5e-2), err2b

    fwd2_f32 = jax.jit(functools.partial(conv_block_forward, stride=stride2, padding=pad2,
                                         compute_dtype=jnp.float32))
    out2_f32 = jax.block_until_ready(fwd2_f32(x2, w2, b2, g2, be2))
    err2f = float(jnp.max(jnp.abs(out2_f32 - ref2)))
    assert jnp.allclose(out2_f32, ref2, rtol=1e-3, atol=1e-3), err2f

    print("KERNEL_OK")
</pallas_src>

<mosaic_0001>
module attributes {stable_mosaic.version = 11 : i64} {
  func.func @_bn_apply_kernel(%arg0: i32, %arg1: memref<8x1xf32, #tpu.memory_space<vmem>>, %arg2: memref<8x1xf32, #tpu.memory_space<vmem>>, %arg3: memref<1x8x256xbf16, #tpu.memory_space<vmem>>, %arg4: memref<1x8x256xf32, #tpu.memory_space<vmem>>) attributes {dimension_semantics = [#tpu.dimension_semantics<parallel>], iteration_bounds = array<i64: 2>, scalar_prefetch = 0 : i64, scratch_operands = 0 : i64, tpu.core_type = #tpu.core_type<tc>, window_params = [{pipeline_mode = #tpu.pipeline_mode<synchronous>, transform_indices = @transform_0, window_bounds = array<i64: 8, 1>}, {pipeline_mode = #tpu.pipeline_mode<synchronous>, transform_indices = @transform_1, window_bounds = array<i64: 8, 1>}, {transform_indices = @transform_2, window_bounds = array<i64: 1, 8, 256>}, {transform_indices = @transform_3, window_bounds = array<i64: 1, 8, 256>}]} {
    %c0 = arith.constant 0 : index
    %c0_0 = arith.constant 0 : index
    %c0_1 = arith.constant 0 : index
    %0 = vector.load %arg3[%c0, %c0_0, %c0_1] : memref<1x8x256xbf16, #tpu.memory_space<vmem>>, vector<1x8x256xbf16>
    %1 = vector.shape_cast %0 : vector<1x8x256xbf16> to vector<8x256xbf16>
    %2 = arith.extf %1 : vector<8x256xbf16> to vector<8x256xf32>
    %c0_2 = arith.constant 0 : index
    %c0_3 = arith.constant 0 : index
    %3 = vector.load %arg1[%c0_2, %c0_3] : memref<8x1xf32, #tpu.memory_space<vmem>>, vector<8x1xf32>
    %4 = vector.broadcast %3 : vector<8x1xf32> to vector<8x256xf32>
    %5 = arith.mulf %2, %4 : vector<8x256xf32>
    %c0_4 = arith.constant 0 : index
    %c0_5 = arith.constant 0 : index
    %6 = vector.load %arg2[%c0_4, %c0_5] : memref<8x1xf32, #tpu.memory_space<vmem>>, vector<8x1xf32>
    %7 = vector.broadcast %6 : vector<8x1xf32> to vector<8x256xf32>
    %8 = arith.addf %5, %7 : vector<8x256xf32>
    %c0_6 = arith.constant 0 : index
    %c0_7 = arith.constant 0 : index
    %c0_8 = arith.constant 0 : index
    %9 = vector.load %arg4[%c0_6, %c0_7, %c0_8] : memref<1x8x256xf32, #tpu.memory_space<vmem>>, vector<1x8x256xf32>
    %10 = vector.shape_cast %9 : vector<1x8x256xf32> to vector<8x256xf32>
    %11 = vector.shape_cast %8 : vector<8x256xf32> to vector<1x8x256xf32>
    tpu.vector_store %arg4[%c0_6, %c0_7, %c0_8], %11 {strides = array<i32>} : memref<1x8x256xf32, #tpu.memory_space<vmem>>, vector<1x8x256xf32>,
    return
  }
  func.func @transform_0(%arg0: i32) -> (i32, i32) {
    %c0_i32 = arith.constant 0 : i32
    %c0_i32_0 = arith.constant 0 : i32
    %c0_i32_1 = arith.constant 0 : i32
    return %c0_i32, %c0_i32_0 : i32, i32
  }
  func.func @transform_1(%arg0: i32) -> (i32, i32) {
    %c0_i32 = arith.constant 0 : i32
    %c0_i32_0 = arith.constant 0 : i32
    %c0_i32_1 = arith.constant 0 : i32
    return %c0_i32, %c0_i32_0 : i32, i32
  }
  func.func @transform_2(%arg0: i32) -> (i32, i32, i32) {
    %c0_i32 = arith.constant 0 : i32
    %c0_i32_0 = arith.constant 0 : i32
    %c0_i32_1 = arith.constant 0 : i32
    return %arg0, %c0_i32, %c0_i32_0 : i32, i32, i32
  }
  func.func @transform_3(%arg0: i32) -> (i32, i32, i32) {
    %c0_i32 = arith.constant 0 : i32
    %c0_i32_0 = arith.constant 0 : i32
    %c0_i32_1 = arith.constant 0 : i32
    return %arg0, %c0_i32, %c0_i32_0 : i32, i32, i32
  }
}

module attributes {stable_mosaic.version = 11 : i64} {
  func.func @_conv_stats_kernel(%arg0: i32, %arg1: memref<9x8x4xbf16, #tpu.memory_space<vmem>>, %arg2: memref<3x1x4x288xbf16, #tpu.memory_space<vmem>>, %arg3: memref<1x8x256xbf16, #tpu.memory_space<vmem>>, %arg4: memref<1x8x1xf32, #tpu.memory_space<vmem>>, %arg5: memref<1x8x1xf32, #tpu.memory_space<vmem>>) attributes {dimension_semantics = [#tpu.dimension_semantics<parallel>], iteration_bounds = array<i64: 2>, scalar_prefetch = 0 : i64, scratch_operands = 0 : i64, tpu.core_type = #tpu.core_type<tc>, window_params = [{pipeline_mode = #tpu.pipeline_mode<synchronous>, transform_indices = @transform_0, window_bounds = array<i64: 9, 8, 4>}, {transform_indices = @transform_1, window_bounds = array<i64: 3, 1, 4, 288>}, {transform_indices = @transform_2, window_bounds = array<i64: 1, 8, 256>}, {transform_indices = @transform_3, window_bounds = array<i64: 1, 8, 1>}, {transform_indices = @transform_4, window_bounds = array<i64: 1, 8, 1>}]} {
    %cst = arith.constant 0.000000e+00 : f32
    %0 = vector.broadcast %cst : f32 to vector<8x256xf32>
    %c0 = arith.constant 0 : index
    %c0_0 = arith.constant 0 : index
    %c0_1 = arith.constant 0 : index
    %c0_2 = arith.constant 0 : index
    %1 = vector.load %arg2[%c0, %c0_0, %c0_1, %c0_2] : memref<3x1x4x288xbf16, #tpu.memory_space<vmem>>, vector<1x1x4x256xbf16>
    %2 = vector.shape_cast %1 : vector<1x1x4x256xbf16> to vector<4x256xbf16>
    %c0_3 = arith.constant 0 : index
    %c0_4 = arith.constant 0 : index
    %c0_5 = arith.constant 0 : index
    %3 = vector.load %arg1[%c0_3, %c0_4, %c0_5] : memref<9x8x4xbf16, #tpu.memory_space<vmem>>, vector<1x8x4xbf16>
    %4 = vector.shape_cast %3 : vector<1x8x4xbf16> to vector<8x4xbf16>
    %cst_6 = arith.constant dense<0.000000e+00> : vector<8x256xf32>
    %5 = tpu.matmul %4, %2, %cst_6 {dimension_numbers = #tpu.dot_dimension_numbers<[1], [0], [0], [1], [0, 0, 1, 1], [], []>} : vector<8x4xbf16>, vector<4x256xbf16>, vector<8x256xf32> -> vector<8x256xf32>
    %6 = arith.addf %0, %5 : vector<8x256xf32>
    %c1 = arith.constant 1 : index
    %c0_7 = arith.constant 0 : index
    %c0_8 = arith.constant 0 : index
    %c0_9 = arith.constant 0 : index
    %7 = vector.load %arg2[%c1, %c0_7, %c0_8, %c0_9] : memref<3x1x4x288xbf16, #tpu.memory_space<vmem>>, vector<1x1x4x256xbf16>
    %8 = vector.shape_cast %7 : vector<1x1x4x256xbf16> to vector<4x256xbf16>
    %c1_10 = arith.constant 1 : index
    %c0_11 = arith.constant 0 : index
    %c0_12 = arith.constant 0 : index
    %9 = vector.load %arg1[%c1_10, %c0_11, %c0_12] : memref<9x8x4xbf16, #tpu.memory_space<vmem>>, vector<1x8x4xbf16>
    %10 = vector.shape_cast %9 : vector<1x8x4xbf16> to vector<8x4xbf16>
    %cst_13 = arith.constant dense<0.000000e+00> : vector<8x256xf32>
    %11 = tpu.matmul %10, %8, %cst_13 {dimension_numbers = #tpu.dot_dimension_numbers<[1], [0], [0], [1], [0, 0, 1, 1], [], []>} : vector<8x4xbf16>, vector<4x256xbf16>, vector<8x256xf32> -> vector<8x256xf32>
    %12 = arith.addf %6, %11 : vector<8x256xf32>
    %c2 = arith.constant 2 : index
    %c0_14 = arith.constant 0 : index
    %c0_15 = arith.constant 0 : index
    %c0_16 = arith.constant 0 : index
    %13 = vector.load %arg2[%c2, %c0_14, %c0_15, %c0_16] : memref<3x1x4x288xbf16, #tpu.memory_space<vmem>>, vector<1x1x4x256xbf16>
    %14 = vector.shape_cast %13 : vector<1x1x4x256xbf16> to vector<4x256xbf16>
    %c2_17 = arith.constant 2 : index
    %c0_18 = arith.constant 0 : index
    %c0_19 = arith.constant 0 : index
    %15 = vector.load %arg1[%c2_17, %c0_18, %c0_19] : memref<9x8x4xbf16, #tpu.memory_space<vmem>>, vector<1x8x4xbf16>
    %16 = vector.shape_cast %15 : vector<1x8x4xbf16> to vector<8x4xbf16>
    %cst_20 = arith.constant dense<0.000000e+00> : vector<8x256xf32>
    %17 = tpu.matmul %16, %14, %cst_20 {dimension_numbers = #tpu.dot_dimension_numbers<[1], [0], [0], [1], [0, 0, 1, 1], [], []>} : vector<8x4xbf16>, vector<4x256xbf16>, vector<8x256xf32> -> vector<8x256xf32>
    %18 = arith.addf %12, %17 : vector<8x256xf32>
    %c0_21 = arith.constant 0 : index
    %c0_22 = arith.constant 0 : index
    %c0_23 = arith.constant 0 : index
    %c16 = arith.constant 16 : index
    %19 = vector.load %arg2[%c0_21, %c0_22, %c0_23, %c16] : memref<3x1x4x288xbf16, #tpu.memory_space<vmem>>, vector<1x1x4x256xbf16>
    %20 = vector.shape_cast %19 : vector<1x1x4x256xbf16> to vector<4x256xbf16>
    %c3 = arith.constant 3 : index
    %c0_24 = arith.constant 0 : index
    %c0_25 = arith.constant 0 : index
    %21 = vector.load %arg1[%c3, %c0_24, %c0_25] : memref<9x8x4xbf16, #tpu.memory_space<vmem>>, vector<1x8x4xbf16>
    %22 = vector.shape_cast %21 : vector<1x8x4xbf16> to vector<8x4xbf16>
    %cst_26 = arith.constant dense<0.000000e+00> : vector<8x256xf32>
    %23 = tpu.matmul %22, %20, %cst_26 {dimension_numbers = #tpu.dot_dimension_numbers<[1], [0], [0], [1], [0, 0, 1, 1], [], []>} : vector<8x4xbf16>, vector<4x256xbf16>, vector<8x256xf32> -> vector<8x256xf32>
    %24 = arith.addf %18, %23 : vector<8x256xf32>
    %c1_27 = arith.constant 1 : index
    %c0_28 = arith.constant 0 : index
    %c0_29 = arith.constant 0 : index
    %c16_30 = arith.constant 16 : index
    %25 = vector.load %arg2[%c1_27, %c0_28, %c0_29, %c16_30] : memref<3x1x4x288xbf16, #tpu.memory_space<vmem>>, vector<1x1x4x256xbf16>
    %26 = vector.shape_cast %25 : vector<1x1x4x256xbf16> to vector<4x256xbf16>
    %c4 = arith.constant 4 : index
    %c0_31 = arith.constant 0 : index
    %c0_32 = arith.constant 0 : index
    %27 = vector.load %arg1[%c4, %c0_31, %c0_32] : memref<9x8x4xbf16, #tpu.memory_space<vmem>>, vector<1x8x4xbf16>
    %28 = vector.shape_cast %27 : vector<1x8x4xbf16> to vector<8x4xbf16>
    %cst_33 = arith.constant dense<0.000000e+00> : vector<8x256xf32>
    %29 = tpu.matmul %28, %26, %cst_33 {dimension_numbers = #tpu.dot_dimension_numbers<[1], [0], [0], [1], [0, 0, 1, 1], [], []>} : vector<8x4xbf16>, vector<4x256xbf16>, vector<8x256xf32> -> vector<8x256xf32>
    %30 = arith.addf %24, %29 : vector<8x256xf32>
    %c2_34 = arith.constant 2 : index
    %c0_35 = arith.constant 0 : index
    %c0_36 = arith.constant 0 : index
    %c16_37 = arith.constant 16 : index
    %31 = vector.load %arg2[%c2_34, %c0_35, %c0_36, %c16_37] : memref<3x1x4x288xbf16, #tpu.memory_space<vmem>>, vector<1x1x4x256xbf16>
    %32 = vector.shape_cast %31 : vector<1x1x4x256xbf16> to vector<4x256xbf16>
    %c5 = arith.constant 5 : index
    %c0_38 = arith.constant 0 : index
    %c0_39 = arith.constant 0 : index
    %33 = vector.load %arg1[%c5, %c0_38, %c0_39] : memref<9x8x4xbf16, #tpu.memory_space<vmem>>, vector<1x8x4xbf16>
    %34 = vector.shape_cast %33 : vector<1x8x4xbf16> to vector<8x4xbf16>
    %cst_40 = arith.constant dense<0.000000e+00> : vector<8x256xf32>
    %35 = tpu.matmul %34, %32, %cst_40 {dimension_numbers = #tpu.dot_dimension_numbers<[1], [0], [0], [1], [0, 0, 1, 1], [], []>} : vector<8x4xbf16>, vector<4x256xbf16>, vector<8x256xf32> -> vector<8x256xf32>
    %36 = arith.addf %30, %35 : vector<8x256xf32>
    %c0_41 = arith.constant 0 : index
    %c0_42 = arith.constant 0 : index
    %c0_43 = arith.constant 0 : index
    %c32 = arith.constant 32 : index
    %37 = vector.load %arg2[%c0_41, %c0_42, %c0_43, %c32] : memref<3x1x4x288xbf16, #tpu.memory_space<vmem>>, vector<1x1x4x256xbf16>
    %38 = vector.shape_cast %37 : vector<1x1x4x256xbf16> to vector<4x256xbf16>
    %c6 = arith.constant 6 : index
    %c0_44 = arith.constant 0 : index
    %c0_45 = arith.constant 0 : index
    %39 = vector.load %arg1[%c6, %c0_44, %c0_45] : memref<9x8x4xbf16, #tpu.memory_space<vmem>>, vector<1x8x4xbf16>
    %40 = vector.shape_cast %39 : vector<1x8x4xbf16> to vector<8x4xbf16>
    %cst_46 = arith.constant dense<0.000000e+00> : vector<8x256xf32>
    %41 = tpu.matmul %40, %38, %cst_46 {dimension_numbers = #tpu.dot_dimension_numbers<[1], [0], [0], [1], [0, 0, 1, 1], [], []>} : vector<8x4xbf16>, vector<4x256xbf16>, vector<8x256xf32> -> vector<8x256xf32>
    %42 = arith.addf %36, %41 : vector<8x256xf32>
    %c1_47 = arith.constant 1 : index
    %c0_48 = arith.constant 0 : index
    %c0_49 = arith.constant 0 : index
    %c32_50 = arith.constant 32 : index
    %43 = vector.load %arg2[%c1_47, %c0_48, %c0_49, %c32_50] : memref<3x1x4x288xbf16, #tpu.memory_space<vmem>>, vector<1x1x4x256xbf16>
    %44 = vector.shape_cast %43 : vector<1x1x4x256xbf16> to vector<4x256xbf16>
    %c7 = arith.constant 7 : index
    %c0_51 = arith.constant 0 : index
    %c0_52 = arith.constant 0 : index
    %45 = vector.load %arg1[%c7, %c0_51, %c0_52] : memref<9x8x4xbf16, #tpu.memory_space<vmem>>, vector<1x8x4xbf16>
    %46 = vector.shape_cast %45 : vector<1x8x4xbf16> to vector<8x4xbf16>
    %cst_53 = arith.constant dense<0.000000e+00> : vector<8x256xf32>
    %47 = tpu.matmul %46, %44, %cst_53 {dimension_numbers = #tpu.dot_dimension_numbers<[1], [0], [0], [1], [0, 0, 1, 1], [], []>} : vector<8x4xbf16>, vector<4x256xbf16>, vector<8x256xf32> -> vector<8x256xf32>
    %48 = arith.addf %42, %47 : vector<8x256xf32>
    %c2_54 = arith.constant 2 : index
    %c0_55 = arith.constant 0 : index
    %c0_56 = arith.constant 0 : index
    %c32_57 = arith.constant 32 : index
    %49 = vector.load %arg2[%c2_54, %c0_55, %c0_56, %c32_57] : memref<3x1x4x288xbf16, #tpu.memory_space<vmem>>, vector<1x1x4x256xbf16>
    %50 = vector.shape_cast %49 : vector<1x1x4x256xbf16> to vector<4x256xbf16>
    %c8 = arith.constant 8 : index
    %c0_58 = arith.constant 0 : index
    %c0_59 = arith.constant 0 : index
    %51 = vector.load %arg1[%c8, %c0_58, %c0_59] : memref<9x8x4xbf16, #tpu.memory_space<vmem>>, vector<1x8x4xbf16>
    %52 = vector.shape_cast %51 : vector<1x8x4xbf16> to vector<8x4xbf16>
    %cst_60 = arith.constant dense<0.000000e+00> : vector<8x256xf32>
    %53 = tpu.matmul %52, %50, %cst_60 {dimension_numbers = #tpu.dot_dimension_numbers<[1], [0], [0], [1], [0, 0, 1, 1], [], []>} : vector<8x4xbf16>, vector<4x256xbf16>, vector<8x256xf32> -> vector<8x256xf32>
    %54 = arith.addf %48, %53 : vector<8x256xf32>
    %55 = arith.truncf %54 : vector<8x256xf32> to vector<8x256xbf16>
    %c0_61 = arith.constant 0 : index
    %c0_62 = arith.constant 0 : index
    %c0_63 = arith.constant 0 : index
    %56 = vector.load %arg3[%c0_61, %c0_62, %c0_63] : memref<1x8x256xbf16, #tpu.memory_space<vmem>>, vector<1x8x256xbf16>
    %57 = vector.shape_cast %56 : vector<1x8x256xbf16> to vector<8x256xbf16>
    %58 = vector.shape_cast %55 : vector<8x256xbf16> to vector<1x8x256xbf16>
    tpu.vector_store %arg3[%c0_61, %c0_62, %c0_63], %58 {strides = array<i32>} : memref<1x8x256xbf16, #tpu.memory_space<vmem>>, vector<1x8x256xbf16>,
    %cst_64 = arith.constant dense<0.000000e+00> : vector<8xf32>
    %59 = vector.multi_reduction <add>, %54, %cst_64 [1] : vector<8x256xf32> to vector<8xf32>
    %60 = vector.shape_cast %59 : vector<8xf32> to vector<8x1xf32>
    %c0_65 = arith.constant 0 : index
    %c0_66 = arith.constant 0 : index
    %c0_67 = arith.constant 0 : index
    %61 = vector.load %arg4[%c0_65, %c0_66, %c0_67] : memref<1x8x1xf32, #tpu.memory_space<vmem>>, vector<1x8x1xf32>
    %62 = vector.shape_cast %61 : vector<1x8x1xf32> to vector<8x1xf32>
    %63 = vector.shape_cast %60 : vector<8x1xf32> to vector<1x8x1xf32>
    tpu.vector_store %arg4[%c0_65, %c0_66, %c0_67], %63 {strides = array<i32>} : memref<1x8x1xf32, #tpu.memory_space<vmem>>, vector<1x8x1xf32>,
    %cst_68 = arith.constant 3.906250e-03 : f32
    %64 = vector.broadcast %cst_68 : f32 to vector<8x1xf32>
    %65 = arith.mulf %60, %64 : vector<8x1xf32>
    %66 = vector.broadcast %65 : vector<8x1xf32> to vector<8x256xf32>
    %67 = arith.subf %54, %66 : vector<8x256xf32>
    %68 = arith.mulf %67, %67 : vector<8x256xf32>
    %cst_69 = arith.constant dense<0.000000e+00> : vector<8xf32>
    %69 = vector.multi_reduction <add>, %68, %cst_69 [1] : vector<8x256xf32> to vector<8xf32>
    %70 = vector.shape_cast %69 : vector<8xf32> to vector<8x1xf32>
    %c0_70 = arith.constant 0 : index
    %c0_71 = arith.constant 0 : index
    %c0_72 = arith.constant 0 : index
    %71 = vector.load %arg5[%c0_70, %c0_71, %c0_72] : memref<1x8x1xf32, #tpu.memory_space<vmem>>, vector<1x8x1xf32>
    %72 = vector.shape_cast %71 : vector<1x8x1xf32> to vector<8x1xf32>
    %73 = vector.shape_cast %70 : vector<8x1xf32> to vector<1x8x1xf32>
    tpu.vector_store %arg5[%c0_70, %c0_71, %c0_72], %73 {strides = array<i32>} : memref<1x8x1xf32, #tpu.memory_space<vmem>>, vector<1x8x1xf32>,
    return
  }
  func.func @transform_0(%arg0: i32) -> (i32, i32, i32) {
    %c0_i32 = arith.constant 0 : i32
    %c0_i32_0 = arith.constant 0 : i32
    %c0_i32_1 = arith.constant 0 : i32
    %c0_i32_2 = arith.constant 0 : i32
    return %c0_i32, %c0_i32_0, %c0_i32_1 : i32, i32, i32
  }
  func.func @transform_1(%arg0: i32) -> (i32, i32, i32, i32) {
    %c0_i32 = arith.constant 0 : i32
    %c0_i32_0 = arith.constant 0 : i32
    %c0_i32_1 = arith.constant 0 : i32
    %c0_i32_2 = arith.constant 0 : i32
    return %c0_i32, %arg0, %c0_i32_0, %c0_i32_1 : i32, i32, i32, i32
  }
  func.func @transform_2(%arg0: i32) -> (i32, i32, i32) {
    %c0_i32 = arith.constant 0 : i32
    %c0_i32_0 = arith.constant 0 : i32
    %c0_i32_1 = arith.constant 0 : i32
    return %arg0, %c0_i32, %c0_i32_0 : i32, i32, i32
  }
  func.func @transform_3(%arg0: i32) -> (i32, i32, i32) {
    %c0_i32 = arith.constant 0 : i32
    %c0_i32_0 = arith.constant 0 : i32
    %c0_i32_1 = arith.constant 0 : i32
    return %arg0, %c0_i32, %c0_i32_0 : i32, i32, i32
  }
  func.func @transform_4(%arg0: i32) -> (i32, i32, i32) {
    %c0_i32 = arith.constant 0 : i32
    %c0_i32_0 = arith.constant 0 : i32
    %c0_i32_1 = arith.constant 0 : i32
    return %arg0, %c0_i32, %c0_i32_0 : i32, i32, i32
  }
}

</mosaic_0001>

<llo_original>
// kernel: conv_block_forward.3
$region0: #{conv_block_forward.3}
  #allocation0 [shape = 'u32[]', space=smem, size = 0x4, offset = 0x4, fixed_abs, tag = 'smem constant byte address 0x4 - core index']
  #allocation1 [shape = 'u32[144,128]{1,0:T(1,128)}', space=vmem, size = 0x12000, scoped, tag = 'internal scratch']
  %s0 = inlined_call_operand.vmem [shape: f32[8,1], index: 0, kind: input, shape index: {}]
  %s1 = inlined_call_operand.vmem [shape: f32[8,1], index: 1, kind: input, shape index: {}]
  %s2 = inlined_call_operand.vmem [shape: bf16[2,8,256], index: 2, kind: input, shape index: {}]
  %s3 = inlined_call_operand.vmem [shape: f32[2,8,256], index: 3, kind: output, shape index: {}]
  %s4 = sld [smem:[#allocation0]]
  $region45: #{conv_block_forward.3} parent=0
    _
  %s6 = ssub.s32 1, %s4
  %s7 = scalar_select 0, %s6, %s4
  loop: start=0, step=1, limit=4
  $region2: #{conv_block_forward.3} parent=0 // loop_pre_header
    _
  $region3: #{conv_block_forward.3} parent=0 // loop_header
    %s9 = sphi 0, %s13
    %p10 = scmp.ge.s32.totalorder %s9, 4
    %s17 = sphi 0, %s17
    %s19 = sphi 0, %s17
    %s20 = sphi 0, %s19
    %s34 = sphi 0, %s20
    %s38 = sphi 0, %s38
    %s40 = sphi 0, %s38
    %s41 = sphi 0, %s40
    %s55 = sphi 0, %s41
    %s61 = sphi 0, %s63
    %s64 = sphi 0, %s61
    %s65 = sphi 0, %s64
    %s81 = sphi 0, %s65
    %s87 = sphi 0, %s89
    %s90 = sphi 0, %s87
    %s91 = sphi 0, %s90
    %s107 = sphi 0, %s91
  $region4: #{conv_block_forward.3} parent=0 // loop_header_branch
    %12 = sbr.rel (%p10) target = $region8
  $region5: #{conv_block_forward.3} parent=0 // loop_body
    %s14 = ssub.s32 %s9, 1
    %s15 = ssub.s32 %s9, 2
    %s16 = sadd.s32 %s9, 1
    %s18 = sadd.s32 %s17, 1
    %p21 = scmp.eq.s32.totalorder %s9, 1
    %p22 = scmp.ne.s32.totalorder %s17, %s19
    %p23 = scmp.eq.s32.totalorder %s9, 0
    %p24 = por %p22, %p23
    %p25 = scmp.ne.s32.totalorder %s17, %s19
    %p26 = scmp.eq.s32.totalorder %s14, 1
    %p27 = por %p25, %p26
    %p28 = scmp.ne.s32.totalorder %s19, %s20
    %p29 = scmp.eq.s32.totalorder %s14, 0
    %p30 = por %p28, %p29
    %p31 = scmp.ne.s32.totalorder %s19, %s20
    %p32 = scmp.eq.s32.totalorder %s15, 1
    %p33 = por %p31, %p32
    %p35 = scmp.ne.s32.totalorder %s20, %s34
    %p36 = scmp.eq.s32.totalorder %s15, 0
    %p37 = por %p35, %p36
    %s39 = sadd.s32 %s38, 1
    %p42 = scmp.eq.s32.totalorder %s9, 1
    %p43 = scmp.ne.s32.totalorder %s38, %s40
    %p44 = scmp.eq.s32.totalorder %s9, 0
    %p45 = por %p43, %p44
    %p46 = scmp.ne.s32.totalorder %s38, %s40
    %p47 = scmp.eq.s32.totalorder %s14, 1
    %p48 = por %p46, %p47
    %p49 = scmp.ne.s32.totalorder %s40, %s41
    %p50 = scmp.eq.s32.totalorder %s14, 0
    %p51 = por %p49, %p50
    %p52 = scmp.ne.s32.totalorder %s40, %s41
    %p53 = scmp.eq.s32.totalorder %s15, 1
    %p54 = por %p52, %p53
    %p56 = scmp.ne.s32.totalorder %s41, %s55
    %p57 = scmp.eq.s32.totalorder %s15, 0
    %p58 = por %p56, %p57
    %s59 = ssub.s32 %s9, %s16
    %p60 = scmp.eq.s32.totalorder %s59, 0
    %s62 = sadd.s32 %s61, 1
    %s63 = scalar_select %p60, %s61, %s62
    %p66 = pneg %p60
    %p67 = scmp.eq.s32.totalorder %s9, 1
    %p68 = por %p66, %p67
    %p69 = scmp.ne.s32.totalorder %s61, %s64
    %p70 = scmp.eq.s32.totalorder %s9, 0
    %p71 = por %p69, %p70
    %p72 = scmp.ne.s32.totalorder %s61, %s64
    %p73 = scmp.eq.s32.totalorder %s14, 1
    %p74 = por %p72, %p73
    %p75 = scmp.ne.s32.totalorder %s64, %s65
    %p76 = scmp.eq.s32.totalorder %s14, 0
    %p77 = por %p75, %p76
    %p78 = scmp.ne.s32.totalorder %s64, %s65
    %p79 = scmp.eq.s32.totalorder %s15, 1
    %p80 = por %p78, %p79
    %p82 = scmp.ne.s32.totalorder %s65, %s81
    %p83 = scmp.eq.s32.totalorder %s15, 0
    %p84 = por %p82, %p83
    %s85 = ssub.s32 %s9, %s16
    %p86 = scmp.eq.s32.totalorder %s85, 0
    %s88 = sadd.s32 %s87, 1
    %s89 = scalar_select %p86, %s87, %s88
    %p92 = pneg %p86
    %p93 = scmp.eq.s32.totalorder %s9, 1
    %p94 = por %p92, %p93
    %p95 = scmp.ne.s32.totalorder %s87, %s90
    %p96 = scmp.eq.s32.totalorder %s9, 0
    %p97 = por %p95, %p96
    %p98 = scmp.ne.s32.totalorder %s87, %s90
    %p99 = scmp.eq.s32.totalorder %s14, 1
    %p100 = por %p98, %p99
    %p101 = scmp.ne.s32.totalorder %s90, %s91
    %p102 = scmp.eq.s32.totalorder %s14, 0
    %p103 = por %p101, %p102
    %p104 = scmp.ne.s32.totalorder %s90, %s91
    %p105 = scmp.eq.s32.totalorder %s15, 1
    %p106 = por %p104, %p105
    %p108 = scmp.ne.s32.totalorder %s91, %s107
    %p109 = scmp.eq.s32.totalorder %s15, 0
    %p110 = por %p108, %p109
    %p111 = scmp.le.s32.totalorder 1, %s9
    %p112 = scmp.lt.s32.totalorder %s9, 3
    %p113 = pnand %p111, %p112
    %p114 = pneg %p113
    // Predicated region
    $region9: #{conv_block_forward.3} parent=5 // pred_check
      _
    $region10: #{conv_block_forward.3} parent=5 // pred_check_branch
      %116 = sbr.rel (%p113) target = $region12
    $region11: #{conv_block_forward.3} parent=5 // pred_region
      %s117 = ssub.s32 %s9, 1
      // Predicated region
      $region13: #{conv_block_forward.3} parent=11 // pred_check
        %p118 = pneg %p30
      $region14: #{conv_block_forward.3} parent=11 // pred_check_branch
        %120 = sbr.rel (%p118) target = $region16
      $region15: #{conv_block_forward.3} parent=11 // pred_region
        _
      $region16: #{conv_block_forward.3} parent=11 // pred_fallthru
        _
      // Predicated region
      $region17: #{conv_block_forward.3} parent=11 // pred_check
        %p121 = pneg %p51
      $region18: #{conv_block_forward.3} parent=11 // pred_check_branch
        %123 = sbr.rel (%p121) target = $region20
      $region19: #{conv_block_forward.3} parent=11 // pred_region
        _
      $region20: #{conv_block_forward.3} parent=11 // pred_fallthru
        _
    $region12: #{conv_block_forward.3} parent=5 // pred_fallthru
      _
    %p124 = scmp.lt.s32.totalorder %s9, 2
    // Predicated region
    $region21: #{conv_block_forward.3} parent=5 // pred_check
      %p125 = pneg %p124
    $region22: #{conv_block_forward.3} parent=5 // pred_check_branch
      %127 = sbr.rel (%p125) target = $region24
    $region23: #{conv_block_forward.3} parent=5 // pred_region
      // Predicated region
      $region25: #{conv_block_forward.3} parent=23 // pred_check
        %p128 = pneg %p71
      $region26: #{conv_block_forward.3} parent=23 // pred_check_branch
        %130 = sbr.rel (%p128) target = $region28
      $region27: #{conv_block_forward.3} parent=23 // pred_region
        %p131 = scmp.lt.s32.totalorder %s9, 1
        %s132 = scalar_select %p131, %s9, 1
        %s133 = smul.addr %s132, 2
        %s134 = smul.addr %s133, 4
        %s135 = scalar_lea.vmem %s2, %s134
      $region28: #{conv_block_forward.3} parent=23 // pred_fallthru
        _
    $region24: #{conv_block_forward.3} parent=5 // pred_fallthru
      _
    %p136 = scmp.le.s32.totalorder 1, %s9
    %p137 = scmp.lt.s32.totalorder %s9, 3
    %p138 = pnand %p136, %p137
    %p139 = pneg %p138
    // Predicated region
    $region29: #{conv_block_forward.3} parent=5 // pred_check
      _
    $region30: #{conv_block_forward.3} parent=5 // pred_check_branch
      %141 = sbr.rel (%p138) target = $region32
    $region31: #{conv_block_forward.3} parent=5 // pred_region
      %s142 = ssub.s32 %s9, 1
      %p143 = pneg %p30
      %p144 = pneg %p27
      %p145 = pneg %p51
      %p146 = pneg %p48
      %p147 = scmp.lt.s32.totalorder %s14, 1
      %s148 = scalar_select %p147, %s14, 1
      %s149 = smul.addr %s148, 2
      %s150 = smul.addr %s149, 4
      %s151 = scalar_lea.vmem %s2, %s150
      %p152 = pneg %p77
      %p153 = pneg %p74
      %p154 = pneg %p103
      %p155 = pneg %p100
      %p156 = scmp.lt.s32.totalorder %s14, 1
      %s157 = scalar_select %p156, %s14, 1
      %s158 = smul.addr %s157, 2
      %s159 = smul.addr %s158, 8
      %s160 = scalar_lea.vmem %s3, %s159
      %p161 = scmp.lt.s32.totalorder %s14, 1
      %s162 = scalar_select %p161, %s14, 1
      %s163 = smul.addr %s162, 2
      %s164 = smul.addr %s163, 4
      %s165 = scalar_lea.vmem %s2, %s164
      %p166 = scmp.lt.s32.totalorder %s14, 1
      %s167 = scalar_select %p166, %s14, 1
      %s168 = smul.addr %s167, 2
      %s169 = smul.addr %s168, 8
      %s170 = scalar_lea.vmem %s3, %s169
      %v171 = vld [vmem:[%s165] sm:$0xff]
      %v172 = vunpack.c.l.bf16 %v171
      %v173 = vunpack.c.h.bf16 %v171
      %v174 = vld [vmem:[%s0] sm:$0xff]
      %176 = vset.pattern.permute.xlu0 0
      %177 = vperm.xlu0 %176, %v174
      %v178 = vpop.permute.xlu0 %177
      %v180 = vmul.f32 %v172, %v178
      %v181 = vmul.f32 %v173, %v178
      %v182 = vld [vmem:[%s1] sm:$0xff]
      %184 = vset.pattern.permute.xlu0 0
      %185 = vperm.xlu0 %184, %v182
      %v186 = vpop.permute.xlu0 %185
      %v188 = vadd.f32 %v180, %v186
      %v189 = vadd.f32 %v181, %v186
      %190 = vst [vmem:[%s170] sm:$0xff] %v188
      %191 = vst [vmem:[%s170 + $0x8] sm:$0xff] %v189
      %p192 = scmp.lt.s32.totalorder %s14, 1
      %s193 = scalar_select %p192, %s14, 1
      %s194 = smul.addr %s193, 2
      %s195 = smul.addr %s194, 8
      %s196 = scalar_lea.vmem %s3, %s195
      // Predicated region
      $region33: #{conv_block_forward.3} parent=31 // pred_check
        %p197 = pneg %p100
      $region34: #{conv_block_forward.3} parent=31 // pred_check_branch
        %199 = sbr.rel (%p197) target = $region36
      $region35: #{conv_block_forward.3} parent=31 // pred_region
        _
      $region36: #{conv_block_forward.3} parent=31 // pred_fallthru
        _
    $region32: #{conv_block_forward.3} parent=5 // pred_fallthru
      _
    %p200 = scmp.le.s32.totalorder 2, %s9
    // Predicated region
    $region37: #{conv_block_forward.3} parent=5 // pred_check
      %p201 = pneg %p200
    $region38: #{conv_block_forward.3} parent=5 // pred_check_branch
      %203 = sbr.rel (%p201) target = $region40
    $region39: #{conv_block_forward.3} parent=5 // pred_region
      %s204 = ssub.s32 %s9, 2
      // Predicated region
      $region41: #{conv_block_forward.3} parent=39 // pred_check
        %p205 = pneg %p106
      $region42: #{conv_block_forward.3} parent=39 // pred_check_branch
        %207 = sbr.rel (%p205) target = $region44
      $region43: #{conv_block_forward.3} parent=39 // pred_region
        %p208 = scmp.lt.s32.totalorder %s15, 1
        %s209 = scalar_select %p208, %s15, 1
        %s210 = smul.addr %s209, 2
        %s211 = smul.addr %s210, 8
        %s212 = scalar_lea.vmem %s3, %s211
      $region44: #{conv_block_forward.3} parent=39 // pred_fallthru
        _
    $region40: #{conv_block_forward.3} parent=5 // pred_fallthru
      _
  $region6: #{conv_block_forward.3} parent=0 // loop_footer
    %s13 = sadd.s32 1, %s9
  $region7: #{conv_block_forward.3} parent=0 // loop_footer_branch
    %8 = sbr.rel target = $region3
  $region8: #{conv_block_forward.3} parent=0 // loop_exit
    _

// kernel: conv_block_forward.2
$region0: #{conv_block_forward.2}
  #allocation0 [shape = 'u32[]', space=smem, size = 0x4, offset = 0x4, fixed_abs, tag = 'smem constant byte address 0x4 - core index']
  #allocation1 [shape = 'u32[144,128]{1,0:T(1,128)}', space=vmem, size = 0x12000, scoped, tag = 'internal scratch']
  %s0 = inlined_call_operand.vmem [shape: bf16[9,8,4], index: 0, kind: input, shape index: {}]
  %s1 = inlined_call_operand.vmem [shape: bf16[3,2,4,288], index: 1, kind: input, shape index: {}]
  %s2 = inlined_call_operand.vmem [shape: bf16[2,8,256], index: 2, kind: output, shape index: {0}]
  %s3 = inlined_call_operand.vmem [shape: f32[2,8,1], index: 3, kind: output, shape index: {1}]
  %s4 = inlined_call_operand.vmem [shape: f32[2,8,1], index: 4, kind: output, shape index: {2}]
  %5 = xla_tuple %s2, %s3, %s4
  %s6 = sld [smem:[#allocation0]]
  $region98: #{conv_block_forward.2} parent=0
    _
  %s8 = ssub.s32 1, %s6
  %s9 = scalar_select 0, %s8, %s6
  $region1: #{conv_block_forward.2} parent=0
    #allocation2 [shape = 'u8[18432]{0}', space=vmem, size = 0x4800, scoped, tag = 'input window, operand 1']
    loop: start=0, step=1, limit=4
    $region2: #{conv_block_forward.2} parent=1 // loop_pre_header
      _
    $region3: #{conv_block_forward.2} parent=1 // loop_header
      %s11 = sphi 0, %s15
      %p12 = scmp.ge.s32.totalorder %s11, 4
      %s19 = sphi 0, %s19
      %s21 = sphi 0, %s19
      %s22 = sphi 0, %s21
      %s36 = sphi 0, %s22
      %s42 = sphi 0, %s44
      %s45 = sphi 0, %s42
      %s46 = sphi 0, %s45
      %s62 = sphi 0, %s46
      %s68 = sphi 0, %s70
      %s71 = sphi 0, %s68
      %s72 = sphi 0, %s71
      %s88 = sphi 0, %s72
      %s94 = sphi 0, %s96
      %s97 = sphi 0, %s94
      %s98 = sphi 0, %s97
      %s114 = sphi 0, %s98
      %s120 = sphi 0, %s122
      %s123 = sphi 0, %s120
      %s124 = sphi 0, %s123
      %s140 = sphi 0, %s124
    $region4: #{conv_block_forward.2} parent=1 // loop_header_branch
      %14 = sbr.rel (%p12) target = $region8
    $region5: #{conv_block_forward.2} parent=1 // loop_body
      %s16 = ssub.s32 %s11, 1
      %s17 = ssub.s32 %s11, 2
      %s18 = sadd.s32 %s11, 1
      %s20 = sadd.s32 %s19, 1
      %p23 = scmp.eq.s32.totalorder %s11, 1
      %p24 = scmp.ne.s32.totalorder %s19, %s21
      %p25 = scmp.eq.s32.totalorder %s11, 0
      %p26 = por %p24, %p25
      %p27 = scmp.ne.s32.totalorder %s19, %s21
      %p28 = scmp.eq.s32.totalorder %s16, 1
      %p29 = por %p27, %p28
      %p30 = scmp.ne.s32.totalorder %s21, %s22
      %p31 = scmp.eq.s32.totalorder %s16, 0
      %p32 = por %p30, %p31
      %p33 = scmp.ne.s32.totalorder %s21, %s22
      %p34 = scmp.eq.s32.totalorder %s17, 1
      %p35 = por %p33, %p34
      %p37 = scmp.ne.s32.totalorder %s22, %s36
      %p38 = scmp.eq.s32.totalorder %s17, 0
      %p39 = por %p37, %p38
      %s40 = ssub.s32 %s11, %s18
      %p41 = scmp.eq.s32.totalorder %s40, 0
      %s43 = sadd.s32 %s42, 1
      %s44 = scalar_select %p41, %s42, %s43
      %p47 = pneg %p41
      %p48 = scmp.eq.s32.totalorder %s11, 1
      %p49 = por %p47, %p48
      %p50 = scmp.ne.s32.totalorder %s42, %s45
      %p51 = scmp.eq.s32.totalorder %s11, 0
      %p52 = por %p50, %p51
      %p53 = scmp.ne.s32.totalorder %s42, %s45
      %p54 = scmp.eq.s32.totalorder %s16, 1
      %p55 = por %p53, %p54
      %p56 = scmp.ne.s32.totalorder %s45, %s46
      %p57 = scmp.eq.s32.totalorder %s16, 0
      %p58 = por %p56, %p57
      %p59 = scmp.ne.s32.totalorder %s45, %s46
      %p60 = scmp.eq.s32.totalorder %s17, 1
      %p61 = por %p59, %p60
      %p63 = scmp.ne.s32.totalorder %s46, %s62
      %p64 = scmp.eq.s32.totalorder %s17, 0
      %p65 = por %p63, %p64
      %s66 = ssub.s32 %s11, %s18
      %p67 = scmp.eq.s32.totalorder %s66, 0
      %s69 = sadd.s32 %s68, 1
      %s70 = scalar_select %p67, %s68, %s69
      %p73 = pneg %p67
      %p74 = scmp.eq.s32.totalorder %s11, 1
      %p75 = por %p73, %p74
      %p76 = scmp.ne.s32.totalorder %s68, %s71
      %p77 = scmp.eq.s32.totalorder %s11, 0
      %p78 = por %p76, %p77
      %p79 = scmp.ne.s32.totalorder %s68, %s71
      %p80 = scmp.eq.s32.totalorder %s16, 1
      %p81 = por %p79, %p80
      %p82 = scmp.ne.s32.totalorder %s71, %s72
      %p83 = scmp.eq.s32.totalorder %s16, 0
      %p84 = por %p82, %p83
      %p85 = scmp.ne.s32.totalorder %s71, %s72
      %p86 = scmp.eq.s32.totalorder %s17, 1
      %p87 = por %p85, %p86
      %p89 = scmp.ne.s32.totalorder %s72, %s88
      %p90 = scmp.eq.s32.totalorder %s17, 0
      %p91 = por %p89, %p90
      %s92 = ssub.s32 %s11, %s18
      %p93 = scmp.eq.s32.totalorder %s92, 0
      %s95 = sadd.s32 %s94, 1
      %s96 = scalar_select %p93, %s94, %s95
      %p99 = pneg %p93
      %p100 = scmp.eq.s32.totalorder %s11, 1
      %p101 = por %p99, %p100
      %p102 = scmp.ne.s32.totalorder %s94, %s97
      %p103 = scmp.eq.s32.totalorder %s11, 0
      %p104 = por %p102, %p103
      %p105 = scmp.ne.s32.totalorder %s94, %s97
      %p106 = scmp.eq.s32.totalorder %s16, 1
      %p107 = por %p105, %p106
      %p108 = scmp.ne.s32.totalorder %s97, %s98
      %p109 = scmp.eq.s32.totalorder %s16, 0
      %p110 = por %p108, %p109
      %p111 = scmp.ne.s32.totalorder %s97, %s98
      %p112 = scmp.eq.s32.totalorder %s17, 1
      %p113 = por %p111, %p112
      %p115 = scmp.ne.s32.totalorder %s98, %s114
      %p116 = scmp.eq.s32.totalorder %s17, 0
      %p117 = por %p115, %p116
      %s118 = ssub.s32 %s11, %s18
      %p119 = scmp.eq.s32.totalorder %s118, 0
      %s121 = sadd.s32 %s120, 1
      %s122 = scalar_select %p119, %s120, %s121
      %p125 = pneg %p119
      %p126 = scmp.eq.s32.totalorder %s11, 1
      %p127 = por %p125, %p126
      %p128 = scmp.ne.s32.totalorder %s120, %s123
      %p129 = scmp.eq.s32.totalorder %s11, 0
      %p130 = por %p128, %p129
      %p131 = scmp.ne.s32.totalorder %s120, %s123
      %p132 = scmp.eq.s32.totalorder %s16, 1
      %p133 = por %p131, %p132
      %p134 = scmp.ne.s32.totalorder %s123, %s124
      %p135 = scmp.eq.s32.totalorder %s16, 0
      %p136 = por %p134, %p135
      %p137 = scmp.ne.s32.totalorder %s123, %s124
      %p138 = scmp.eq.s32.totalorder %s17, 1
      %p139 = por %p137, %p138
      %p141 = scmp.ne.s32.totalorder %s124, %s140
      %p142 = scmp.eq.s32.totalorder %s17, 0
      %p143 = por %p141, %p142
      %p144 = scmp.le.s32.totalorder 1, %s11
      %p145 = scmp.lt.s32.totalorder %s11, 3
      %p146 = pnand %p144, %p145
      %p147 = pneg %p146
      // Predicated region
      $region9: #{conv_block_forward.2} parent=5 // pred_check
        _
      $region10: #{conv_block_forward.2} parent=5 // pred_check_branch
        %149 = sbr.rel (%p146) target = $region12
      $region11: #{conv_block_forward.2} parent=5 // pred_region
        %s150 = ssub.s32 %s11, 1
        // Predicated region
        $region13: #{conv_block_forward.2} parent=11 // pred_check
          %p151 = pneg %p32
        $region14: #{conv_block_forward.2} parent=11 // pred_check_branch
          %153 = sbr.rel (%p151) target = $region16
        $region15: #{conv_block_forward.2} parent=11 // pred_region
          _
        $region16: #{conv_block_forward.2} parent=11 // pred_fallthru
          _
      $region12: #{conv_block_forward.2} parent=5 // pred_fallthru
        _
      %p154 = scmp.lt.s32.totalorder %s11, 2
      // Predicated region
      $region17: #{conv_block_forward.2} parent=5 // pred_check
        %p155 = pneg %p154
      $region18: #{conv_block_forward.2} parent=5 // pred_check_branch
        %157 = sbr.rel (%p155) target = $region20
      $region19: #{conv_block_forward.2} parent=5 // pred_region
        // Predicated region
        $region21: #{conv_block_forward.2} parent=19 // pred_check
          %p158 = pneg %p52
        $region22: #{conv_block_forward.2} parent=19 // pred_check_branch
          %160 = sbr.rel (%p158) target = $region24
        $region23: #{conv_block_forward.2} parent=19 // pred_region
          %s161 = sand.u32 %s42, 1
          %s162 = sand.u32 %s42, 1
          %s163 = smul.addr %s162, 18
          %s164 = scalar_lea.vmem [#allocation2], %s163
          %s165 = smul.addr %s11, 3
          %s166 = smul.addr %s165, 2
          %s167 = scalar_lea.vmem %s1, %s166
          // Predicated region
          $region25: #{conv_block_forward.2} parent=23 // pred_check
            _
          $region26: #{conv_block_forward.2} parent=23 // pred_check_branch
            %169 = sbr.rel (0) target = $region28
          $region27: #{conv_block_forward.2} parent=23 // pred_region
            // Predicated region
            $region29: #{conv_block_forward.2} parent=27 // pred_check
              _
            $region30: #{conv_block_forward.2} parent=27 // pred_check_branch
              %171 = sbr.rel target = $region32
            $region31: #{conv_block_forward.2} parent=27 // pred_region
              // Predicated region
              $region44: #{conv_block_forward.2} parent=31 // pred_check
                _
              $region45: #{conv_block_forward.2} parent=31 // pred_check_branch
                %191 = sbr.rel (0) target = $region47
              $region46: #{conv_block_forward.2} parent=31 // pred_region
                loop: start=0, step=1, limit=1
                $region48: #{conv_block_forward.2} parent=46 // loop_pre_header
                  _
                $region49: #{conv_block_forward.2} parent=46 // loop_header
                  %s193 = sphi 0, %s197
                  %p194 = scmp.ge.s32.totalorder %s193, 1
                  %s198 = sphi %s167, %s167
                  %s199 = sphi %s164, %s164
                $region50: #{conv_block_forward.2} parent=46 // loop_header_branch
                  %196 = sbr.rel (%p194) target = $region54
                $region51: #{conv_block_forward.2} parent=46 // loop_body
                  _
                $region52: #{conv_block_forward.2} parent=46 // loop_footer
                  %s197 = sadd.s32 1, %s193
                $region53: #{conv_block_forward.2} parent=46 // loop_footer_branch
                  %192 = sbr.rel target = $region49
                $region54: #{conv_block_forward.2} parent=46 // loop_exit
                  _
                %s201 = ssub.s32 64, 1
                loop: start=0, step=1, limit=1
                $region55: #{conv_block_forward.2} parent=46 // loop_pre_header
                  _
                $region56: #{conv_block_forward.2} parent=46 // loop_header
                  %s203 = sphi 0, %s207
                  %p204 = scmp.ge.s32.totalorder %s203, 1
                  %s208 = sphi %s167, %s167
                  %s209 = sphi %s164, %s164
                $region57: #{conv_block_forward.2} parent=46 // loop_header_branch
                  %206 = sbr.rel (%p204) target = $region61
                $region58: #{conv_block_forward.2} parent=46 // loop_body
                  %v210 = vld [vmem:[%s208] sm:%s201]
                  %211 = vst [vmem:[%s209] sm:%s201] %v210
                  %v212 = vld [vmem:[%s208 + $0xc] sm:%s201]
                  %213 = vst [vmem:[%s209 + $0x6] sm:%s201] %v212
                  %v214 = vld [vmem:[%s208 + $0x18] sm:%s201]
                  %215 = vst [vmem:[%s209 + $0xc] sm:%s201] %v214
                $region59: #{conv_block_forward.2} parent=46 // loop_footer
                  %s207 = sadd.s32 1, %s203
                $region60: #{conv_block_forward.2} parent=46 // loop_footer_branch
                  %202 = sbr.rel target = $region56
                $region61: #{conv_block_forward.2} parent=46 // loop_exit
                  _
              $region47: #{conv_block_forward.2} parent=31 // pred_fallthru
                _
            $region32: #{conv_block_forward.2} parent=27 // pred_fallthru
              _
            // Predicated region
            $region33: #{conv_block_forward.2} parent=27 // pred_check
              _
            $region34: #{conv_block_forward.2} parent=27 // pred_check_branch
              %173 = sbr.rel (0) target = $region36
            $region35: #{conv_block_forward.2} parent=27 // pred_region
              %s175 = ssub.s32 64, 1
              loop: start=0, step=1, limit=1
              $region37: #{conv_block_forward.2} parent=35 // loop_pre_header
                _
              $region38: #{conv_block_forward.2} parent=35 // loop_header
                %s177 = sphi 0, %s181
                %p178 = scmp.ge.s32.totalorder %s177, 1
                %s182 = sphi %s167, %s167
                %s183 = sphi %s164, %s164
              $region39: #{conv_block_forward.2} parent=35 // loop_header_branch
                %180 = sbr.rel (%p178) target = $region43
              $region40: #{conv_block_forward.2} parent=35 // loop_body
                %v184 = vld [vmem:[%s182] sm:%s175]
                %185 = vst [vmem:[%s183] sm:%s175] %v184
                %v186 = vld [vmem:[%s182 + $0xc] sm:%s175]
                %187 = vst [vmem:[%s183 + $0x6] sm:%s175] %v186
                %v188 = vld [vmem:[%s182 + $0x18] sm:%s175]
                %189 = vst [vmem:[%s183 + $0xc] sm:%s175] %v188
              $region41: #{conv_block_forward.2} parent=35 // loop_footer
                %s181 = sadd.s32 1, %s177
              $region42: #{conv_block_forward.2} parent=35 // loop_footer_branch
                %176 = sbr.rel target = $region38
              $region43: #{conv_block_forward.2} parent=35 // loop_exit
                _
            $region36: #{conv_block_forward.2} parent=27 // pred_fallthru
              _
          $region28: #{conv_block_forward.2} parent=23 // pred_fallthru
            _
          %216 = vnop
        $region24: #{conv_block_forward.2} parent=19 // pred_fallthru
          _
      $region20: #{conv_block_forward.2} parent=5 // pred_fallthru
        _
      %p217 = scmp.le.s32.totalorder 1, %s11
      %p218 = scmp.lt.s32.totalorder %s11, 3
      %p219 = pnand %p217, %p218
      %p220 = pneg %p219
      // Predicated region
      $region62: #{conv_block_forward.2} parent=5 // pred_check
        _
      $region63: #{conv_block_forward.2} parent=5 // pred_check_branch
        %222 = sbr.rel (%p219) target = $region65
      $region64: #{conv_block_forward.2} parent=5 // pred_region
        %s223 = ssub.s32 %s11, 1
        %s224 = sand.u32 %s45, 1
        %s225 = sand.u32 %s45, 1
        %s226 = smul.addr %s225, 18
        %s227 = scalar_lea.vmem [#allocation2], %s226
        // Predicated region
        $region66: #{conv_block_forward.2} parent=64 // pred_check
          %p228 = pneg %p58
        $region67: #{conv_block_forward.2} parent=64 // pred_check_branch
          %230 = sbr.rel (%p228) target = $region69
        $region68: #{conv_block_forward.2} parent=64 // pred_region
          _
        $region69: #{conv_block_forward.2} parent=64 // pred_fallthru
          _
        %p231 = pneg %p32
        %p232 = pneg %p29
        %s233 = sand.u32 %s45, 1
        %s234 = sand.u32 %s45, 1
        %s235 = smul.addr %s234, 18
        %s236 = scalar_lea.vmem [#allocation2], %s235
        %p237 = pneg %p58
        %p238 = pneg %p55
        %p239 = pneg %p84
        %p240 = pneg %p81
        %p241 = scmp.lt.s32.totalorder %s16, 1
        %s242 = scalar_select %p241, %s16, 1
        %s243 = smul.addr %s242, 2
        %s244 = smul.addr %s243, 4
        %s245 = scalar_lea.vmem %s2, %s244
        %p246 = pneg %p110
        %p247 = pneg %p107
        %p248 = scmp.lt.s32.totalorder %s16, 1
        %s249 = scalar_select %p248, %s16, 1
        %s250 = smul.addr %s249, 8
        %s251 = scalar_lea.vmem %s3, %s250
        %p252 = pneg %p136
        %p253 = pneg %p133
        %p254 = scmp.lt.s32.totalorder %s16, 1
        %s255 = scalar_select %p254, %s16, 1
        %s256 = smul.addr %s255, 8
        %s257 = scalar_lea.vmem %s4, %s256
        %p258 = scmp.lt.s32.totalorder %s16, 1
        %s259 = scalar_select %p258, %s16, 1
        %s260 = smul.addr %s259, 2
        %s261 = smul.addr %s260, 4
        %s262 = scalar_lea.vmem %s2, %s261
        %p263 = scmp.lt.s32.totalorder %s16, 1
        %s264 = scalar_select %p263, %s16, 1
        %s265 = smul.addr %s264, 8
        %s266 = scalar_lea.vmem %s3, %s265
        %p267 = scmp.lt.s32.totalorder %s16, 1
        %s268 = scalar_select %p267, %s16, 1
        %s269 = smul.addr %s268, 8
        %s270 = scalar_lea.vmem %s4, %s269
        %v272 = vld [vmem:[%s227] sm:$0xf]
        %v273 = vld [vmem:[%s0] sm:$0xf]
        %s274 = scalar_lea.vmem %s227, 6 [#allocation2]
        %v275 = vld [vmem:[%s274] sm:$0xf]
        %s276 = scalar_lea.vmem %s0, 4
        %v277 = vld [vmem:[%s276] sm:$0xf]
        %v280 = vunpack.c.l.s4 1983009808
        %v281 = vunpack.c.0.s8 %v280
        %v282 = vlaneseq
        %v283 = vshrl.u32 %v282, 7
        %v284 = vsub.s32 %v281, %v283
        %v285 = vrot.slane %v275, %v284
        %v286 = vcombine.high %v285, %v285
        %vm287 = vcmask 31744
        %v289 = vsel %vm287, %v277, 0
        %vm291 = vcmask 1041408
        %v293 = vsel %vm291, %v285, 0
        %v296 = vsel %vm291, %v286, 0
        %298 = vmatprep.subr.bf16.mxu0 0
        %299 = vmatpush1.bf16.msra.mxu0 0
        %300 = vmatprep.subr.bf16.mxu0 0
        %301 = vmatpush1.bf16.msra.mxu0 0
        %302 = vmatprep.subr.bf16.mxu0 0
        %303 = vmatpush1.bf16.msra.mxu0 0
        %304 = vmatprep.subr.bf16.mxu0 0
        %305 = vmatpush1.bf16.msra.mxu0 0
        %306 = vmatprep.subr.bf16.mxu0 0
        %307 = vmatpush1.bf16.msra.mxu0 0
        %308 = vmatprep.subr.bf16.mxu0 0
        %309 = vmatpush1.bf16.msra.mxu0 0
        %310 = vmatprep.subr.bf16.mxu0 0
        %311 = vmatpush1.bf16.msra.mxu0 0
        %312 = vmatprep.subr.bf16.mxu0 %v296
        %313 = vmatpush1.bf16.msra.mxu0 %v293
        %314 = vmatprep.subr.bf16.mxu0 0
        %315 = vmatpush2.bf16.msra.mxu0 0
        %316 = vmatprep.subr.bf16.mxu0 0
        %317 = vmatpush2.bf16.msra.mxu0 0
        %318 = vmatprep.subr.bf16.mxu0 0
        %319 = vmatpush2.bf16.msra.mxu0 0
        %320 = vmatprep.subr.bf16.mxu0 0
        %321 = vmatpush2.bf16.msra.mxu0 0
        %322 = vmatprep.subr.bf16.mxu0 0
        %323 = vmatpush2.bf16.msra.mxu0 0
        %324 = vmatprep.subr.bf16.mxu0 0
        %325 = vmatpush2.bf16.msra.mxu0 0
        %326 = vmatprep.subr.bf16.mxu0 0
        %327 = vmatpush2.bf16.msra.mxu0 0
        %328 = vmatprep.subr.bf16.mxu0 0
        %329 = vmatpush2.bf16.msra.mxu0 0
        %330 = vmatprep.mubr.bf16.mxu0 0
        %331 = vmatmul.mubr.bf16.gmra.mxu0 %v289
        %v332 = vpop.f32.mrf.mxu0
        %v333 = vadd.f32 0.0, %v332
        %v334 = vpop.f32.mrf.mxu0
        %v335 = vadd.f32 0.0, %v334
        %v336 = vpop.f32.mrf.mxu0
        %v337 = vpop.f32.mrf.mxu0
        %338 = vdwg.mxu0
        %v341 = vunpack.c.l.s4 1983009808
        %v342 = vunpack.c.0.s8 %v341
        %v343 = vlaneseq
        %v344 = vshrl.u32 %v343, 7
        %v345 = vsub.s32 %v342, %v344
        %v346 = vrot.slane %v272, %v345
        %v347 = vcombine.high %v346, %v346
        %v349 = vsel %vm287, %v273, 0
        %v352 = vsel %vm291, %v346, 0
        %v355 = vsel %vm291, %v347, 0
        %357 = vmatprep.subr.bf16.mxu0 0
        %358 = vmatpush1.bf16.msra.mxu0 0
        %359 = vmatprep.subr.bf16.mxu0 0
        %360 = vmatpush1.bf16.msra.mxu0 0
        %361 = vmatprep.subr.bf16.mxu0 0
        %362 = vmatpush1.bf16.msra.mxu0 0
        %363 = vmatprep.subr.bf16.mxu0 0
        %364 = vmatpush1.bf16.msra.mxu0 0
        %365 = vmatprep.subr.bf16.mxu0 0
        %366 = vmatpush1.bf16.msra.mxu0 0
        %367 = vmatprep.subr.bf16.mxu0 0
        %368 = vmatpush1.bf16.msra.mxu0 0
        %369 = vmatprep.subr.bf16.mxu0 0
        %370 = vmatpush1.bf16.msra.mxu0 0
        %371 = vmatprep.subr.bf16.mxu0 %v355
        %372 = vmatpush1.bf16.msra.mxu0 %v352
        %373 = vmatprep.subr.bf16.mxu0 0
        %374 = vmatpush2.bf16.msra.mxu0 0
        %375 = vmatprep.subr.bf16.mxu0 0
        %376 = vmatpush2.bf16.msra.mxu0 0
        %377 = vmatprep.subr.bf16.mxu0 0
        %378 = vmatpush2.bf16.msra.mxu0 0
        %379 = vmatprep.subr.bf16.mxu0 0
        %380 = vmatpush2.bf16.msra.mxu0 0
        %381 = vmatprep.subr.bf16.mxu0 0
        %382 = vmatpush2.bf16.msra.mxu0 0
        %383 = vmatprep.subr.bf16.mxu0 0
        %384 = vmatpush2.bf16.msra.mxu0 0
        %385 = vmatprep.subr.bf16.mxu0 0
        %386 = vmatpush2.bf16.msra.mxu0 0
        %387 = vmatprep.subr.bf16.mxu0 0
        %388 = vmatpush2.bf16.msra.mxu0 0
        %389 = vmatprep.mubr.bf16.mxu0 0
        %390 = vmatmul.mubr.bf16.gmra.mxu0 %v349
        %v391 = vpop.f32.mrf.mxu0
        %v392 = vadd.f32 %v333, %v391
        %v393 = vpop.f32.mrf.mxu0
        %v394 = vadd.f32 %v335, %v393
        %v395 = vpop.f32.mrf.mxu0
        %v396 = vpop.f32.mrf.mxu0
        %397 = vdwg.mxu0
        %s398 = scalar_lea.vmem %s227, 12 [#allocation2]
        %v399 = vld [vmem:[%s398] sm:$0xf]
        %s400 = scalar_lea.vmem %s0, 8
        %v401 = vld [vmem:[%s400] sm:$0xf]
        %v404 = vunpack.c.l.s4 1983009808
        %v405 = vunpack.c.0.s8 %v404
        %v406 = vlaneseq
        %v407 = vshrl.u32 %v406, 7
        %v408 = vsub.s32 %v405, %v407
        %v409 = vrot.slane %v399, %v408
        %v410 = vcombine.high %v409, %v409
        %v412 = vsel %vm287, %v401, 0
        %v415 = vsel %vm291, %v409, 0
        %v418 = vsel %vm291, %v410, 0
        %420 = vmatprep.subr.bf16.mxu0 0
        %421 = vmatpush1.bf16.msra.mxu0 0
        %422 = vmatprep.subr.bf16.mxu0 0
        %423 = vmatpush1.bf16.msra.mxu0 0
        %424 = vmatprep.subr.bf16.mxu0 0
        %425 = vmatpush1.bf16.msra.mxu0 0
        %426 = vmatprep.subr.bf16.mxu0 0
        %427 = vmatpush1.bf16.msra.mxu0 0
        %428 = vmatprep.subr.bf16.mxu0 0
        %429 = vmatpush1.bf16.msra.mxu0 0
        %430 = vmatprep.subr.bf16.mxu0 0
        %431 = vmatpush1.bf16.msra.mxu0 0
        %432 = vmatprep.subr.bf16.mxu0 0
        %433 = vmatpush1.bf16.msra.mxu0 0
        %434 = vmatprep.subr.bf16.mxu0 %v418
        %435 = vmatpush1.bf16.msra.mxu0 %v415
        %436 = vmatprep.subr.bf16.mxu0 0
        %437 = vmatpush2.bf16.msra.mxu0 0
        %438 = vmatprep.subr.bf16.mxu0 0
        %439 = vmatpush2.bf16.msra.mxu0 0
        %440 = vmatprep.subr.bf16.mxu0 0
        %441 = vmatpush2.bf16.msra.mxu0 0
        %442 = vmatprep.subr.bf16.mxu0 0
        %443 = vmatpush2.bf16.msra.mxu0 0
        %444 = vmatprep.subr.bf16.mxu0 0
        %445 = vmatpush2.bf16.msra.mxu0 0
        %446 = vmatprep.subr.bf16.mxu0 0
        %447 = vmatpush2.bf16.msra.mxu0 0
        %448 = vmatprep.subr.bf16.mxu0 0
        %449 = vmatpush2.bf16.msra.mxu0 0
        %450 = vmatprep.subr.bf16.mxu0 0
        %451 = vmatpush2.bf16.msra.mxu0 0
        %452 = vmatprep.mubr.bf16.mxu0 0
        %453 = vmatmul.mubr.bf16.gmra.mxu0 %v412
        %v454 = vpop.f32.mrf.mxu0
        %v455 = vadd.f32 0.0, %v454
        %v456 = vpop.f32.mrf.mxu0
        %v457 = vadd.f32 0.0, %v456
        %v458 = vpop.f32.mrf.mxu0
        %v459 = vpop.f32.mrf.mxu0
        %460 = vdwg.mxu0
        %v461 = vadd.f32 %v392, %v455
        %v462 = vadd.f32 %v394, %v457
        %v463 = vld [vmem:[%s227] sm:$0x3f]
        %s464 = scalar_lea.vmem %s0, 12
        %v465 = vld [vmem:[%s464] sm:$0xf]
        %v467 = vcombine.high %v463, %v463
        %v469 = vunpack.c.l.s4 1983009808
        %v470 = vunpack.c.0.s8 %v469
        %v471 = vlaneseq
        %v472 = vshrl.u32 %v471, 7
        %v473 = vsub.s32 %v470, %v472
        %v474 = vrot.slane %v463, %v473
        %v476 = vunpack.c.l.s4 1983009808
        %v477 = vunpack.c.0.s8 %v476
        %v478 = vlaneseq
        %v479 = vshrl.u32 %v478, 7
        %v480 = vsub.s32 %v477, %v479
        %v481 = vrot.slane %v467, %v480
        %v482 = vcombine.high %v474, %v474
        %483 = vrot.lane.b32.xlu0 %v474, 112
        %v484 = vpop.permute.xlu0 %483
        %485 = vrot.lane.b32.xlu0 %v482, 112
        %v486 = vpop.permute.xlu0 %485
        %487 = vrot.lane.b32.xlu0 %v481, 112
        %v488 = vpop.permute.xlu0 %487
        %vm489 = vcmask 916480
        %v490 = vsel %vm489, %v484, %v486
        %v491 = vsel %vm489, %v486, %v488
        %v493 = vsel %vm287, %v465, 0
        %v496 = vsel %vm291, %v490, 0
        %v499 = vsel %vm291, %v491, 0
        %501 = vmatprep.subr.bf16.mxu0 0
        %502 = vmatpush1.bf16.msra.mxu0 0
        %503 = vmatprep.subr.bf16.mxu0 0
        %504 = vmatpush1.bf16.msra.mxu0 0
        %505 = vmatprep.subr.bf16.mxu0 0
        %506 = vmatpush1.bf16.msra.mxu0 0
        %507 = vmatprep.subr.bf16.mxu0 0
        %508 = vmatpush1.bf16.msra.mxu0 0
        %509 = vmatprep.subr.bf16.mxu0 0
        %510 = vmatpush1.bf16.msra.mxu0 0
        %511 = vmatprep.subr.bf16.mxu0 0
        %512 = vmatpush1.bf16.msra.mxu0 0
        %513 = vmatprep.subr.bf16.mxu0 0
        %514 = vmatpush1.bf16.msra.mxu0 0
        %515 = vmatprep.subr.bf16.mxu0 %v499
        %516 = vmatpush1.bf16.msra.mxu0 %v496
        %517 = vmatprep.subr.bf16.mxu0 0
        %518 = vmatpush2.bf16.msra.mxu0 0
        %519 = vmatprep.subr.bf16.mxu0 0
        %520 = vmatpush2.bf16.msra.mxu0 0
        %521 = vmatprep.subr.bf16.mxu0 0
        %522 = vmatpush2.bf16.msra.mxu0 0
        %523 = vmatprep.subr.bf16.mxu0 0
        %524 = vmatpush2.bf16.msra.mxu0 0
        %525 = vmatprep.subr.bf16.mxu0 0
        %526 = vmatpush2.bf16.msra.mxu0 0
        %527 = vmatprep.subr.bf16.mxu0 0
        %528 = vmatpush2.bf16.msra.mxu0 0
        %529 = vmatprep.subr.bf16.mxu0 0
        %530 = vmatpush2.bf16.msra.mxu0 0
        %531 = vmatprep.subr.bf16.mxu0 0
        %532 = vmatpush2.bf16.msra.mxu0 0
        %533 = vmatprep.mubr.bf16.mxu0 0
        %534 = vmatmul.mubr.bf16.gmra.mxu0 %v493
        %v535 = vpop.f32.mrf.mxu0
        %v536 = vadd.f32 0.0, %v535
        %v537 = vpop.f32.mrf.mxu0
        %v538 = vadd.f32 0.0, %v537
        %v539 = vpop.f32.mrf.mxu0
        %v540 = vpop.f32.mrf.mxu0
        %541 = vdwg.mxu0
        %v542 = vadd.f32 %v461, %v536
        %v543 = vadd.f32 %v462, %v538
        %v544 = vld [vmem:[%s274] sm:$0x3f]
        %s545 = scalar_lea.vmem %s0, 16
        %v546 = vld [vmem:[%s545] sm:$0xf]
        %v548 = vcombine.high %v544, %v544
        %v550 = vunpack.c.l.s4 1983009808
        %v551 = vunpack.c.0.s8 %v550
        %v552 = vlaneseq
        %v553 = vshrl.u32 %v552, 7
        %v554 = vsub.s32 %v551, %v553
        %v555 = vrot.slane %v544, %v554
        %v557 = vunpack.c.l.s4 1983009808
        %v558 = vunpack.c.0.s8 %v557
        %v559 = vlaneseq
        %v560 = vshrl.u32 %v559, 7
        %v561 = vsub.s32 %v558, %v560
        %v562 = vrot.slane %v548, %v561
        %v563 = vcombine.high %v555, %v555
        %564 = vrot.lane.b32.xlu0 %v555, 112
        %v565 = vpop.permute.xlu0 %564
        %566 = vrot.lane.b32.xlu0 %v563, 112
        %v567 = vpop.permute.xlu0 %566
        %568 = vrot.lane.b32.xlu0 %v562, 112
        %v569 = vpop.permute.xlu0 %568
        %v570 = vsel %vm489, %v565, %v567
        %v571 = vsel %vm489, %v567, %v569
        %v573 = vsel %vm287, %v546, 0
        %v576 = vsel %vm291, %v570, 0
        %v579 = vsel %vm291, %v571, 0
        %581 = vmatprep.subr.bf16.mxu0 0
        %582 = vmatpush1.bf16.msra.mxu0 0
        %583 = vmatprep.subr.bf16.mxu0 0
        %584 = vmatpush1.bf16.msra.mxu0 0
        %585 = vmatprep.subr.bf16.mxu0 0
        %586 = vmatpush1.bf16.msra.mxu0 0
        %587 = vmatprep.subr.bf16.mxu0 0
        %588 = vmatpush1.bf16.msra.mxu0 0
        %589 = vmatprep.subr.bf16.mxu0 0
        %590 = vmatpush1.bf16.msra.mxu0 0
        %591 = vmatprep.subr.bf16.mxu0 0
        %592 = vmatpush1.bf16.msra.mxu0 0
        %593 = vmatprep.subr.bf16.mxu0 0
        %594 = vmatpush1.bf16.msra.mxu0 0
        %595 = vmatprep.subr.bf16.mxu0 %v579
        %596 = vmatpush1.bf16.msra.mxu0 %v576
        %597 = vmatprep.subr.bf16.mxu0 0
        %598 = vmatpush2.bf16.msra.mxu0 0
        %599 = vmatprep.subr.bf16.mxu0 0
        %600 = vmatpush2.bf16.msra.mxu0 0
        %601 = vmatprep.subr.bf16.mxu0 0
        %602 = vmatpush2.bf16.msra.mxu0 0
        %603 = vmatprep.subr.bf16.mxu0 0
        %604 = vmatpush2.bf16.msra.mxu0 0
        %605 = vmatprep.subr.bf16.mxu0 0
        %606 = vmatpush2.bf16.msra.mxu0 0
        %607 = vmatprep.subr.bf16.mxu0 0
        %608 = vmatpush2.bf16.msra.mxu0 0
        %609 = vmatprep.subr.bf16.mxu0 0
        %610 = vmatpush2.bf16.msra.mxu0 0
        %611 = vmatprep.subr.bf16.mxu0 0
        %612 = vmatpush2.bf16.msra.mxu0 0
        %613 = vmatprep.mubr.bf16.mxu0 0
        %614 = vmatmul.mubr.bf16.gmra.mxu0 %v573
        %v615 = vpop.f32.mrf.mxu0
        %v616 = vadd.f32 0.0, %v615
        %v617 = vpop.f32.mrf.mxu0
        %v618 = vadd.f32 0.0, %v617
        %v619 = vpop.f32.mrf.mxu0
        %v620 = vpop.f32.mrf.mxu0
        %621 = vdwg.mxu0
        %v622 = vadd.f32 %v542, %v616
        %v623 = vadd.f32 %v543, %v618
        %v624 = vld [vmem:[%s398] sm:$0x3f]
        %s625 = scalar_lea.vmem %s0, 20
        %v626 = vld [vmem:[%s625] sm:$0xf]
        %v628 = vcombine.high %v624, %v624
        %v630 = vunpack.c.l.s4 1983009808
        %v631 = vunpack.c.0.s8 %v630
        %v632 = vlaneseq
        %v633 = vshrl.u32 %v632, 7
        %v634 = vsub.s32 %v631, %v633
        %v635 = vrot.slane %v624, %v634
        %v637 = vunpack.c.l.s4 1983009808
        %v638 = vunpack.c.0.s8 %v637
        %v639 = vlaneseq
        %v640 = vshrl.u32 %v639, 7
        %v641 = vsub.s32 %v638, %v640
        %v642 = vrot.slane %v628, %v641
        %v643 = vcombine.high %v635, %v635
        %644 = vrot.lane.b32.xlu0 %v635, 112
        %v645 = vpop.permute.xlu0 %644
        %646 = vrot.lane.b32.xlu0 %v643, 112
        %v647 = vpop.permute.xlu0 %646
        %648 = vrot.lane.b32.xlu0 %v642, 112
        %v649 = vpop.permute.xlu0 %648
        %v650 = vsel %vm489, %v645, %v647
        %v651 = vsel %vm489, %v647, %v649
        %v653 = vsel %vm287, %v626, 0
        %v656 = vsel %vm291, %v650, 0
        %v659 = vsel %vm291, %v651, 0
        %661 = vmatprep.subr.bf16.mxu0 0
        %662 = vmatpush1.bf16.msra.mxu0 0
        %663 = vmatprep.subr.bf16.mxu0 0
        %664 = vmatpush1.bf16.msra.mxu0 0
        %665 = vmatprep.subr.bf16.mxu0 0
        %666 = vmatpush1.bf16.msra.mxu0 0
        %667 = vmatprep.subr.bf16.mxu0 0
        %668 = vmatpush1.bf16.msra.mxu0 0
        %669 = vmatprep.subr.bf16.mxu0 0
        %670 = vmatpush1.bf16.msra.mxu0 0
        %671 = vmatprep.subr.bf16.mxu0 0
        %672 = vmatpush1.bf16.msra.mxu0 0
        %673 = vmatprep.subr.bf16.mxu0 0
        %674 = vmatpush1.bf16.msra.mxu0 0
        %675 = vmatprep.subr.bf16.mxu0 %v659
        %676 = vmatpush1.bf16.msra.mxu0 %v656
        %677 = vmatprep.subr.bf16.mxu0 0
        %678 = vmatpush2.bf16.msra.mxu0 0
        %679 = vmatprep.subr.bf16.mxu0 0
        %680 = vmatpush2.bf16.msra.mxu0 0
        %681 = vmatprep.subr.bf16.mxu0 0
        %682 = vmatpush2.bf16.msra.mxu0 0
        %683 = vmatprep.subr.bf16.mxu0 0
        %684 = vmatpush2.bf16.msra.mxu0 0
        %685 = vmatprep.subr.bf16.mxu0 0
        %686 = vmatpush2.bf16.msra.mxu0 0
        %687 = vmatprep.subr.bf16.mxu0 0
        %688 = vmatpush2.bf16.msra.mxu0 0
        %689 = vmatprep.subr.bf16.mxu0 0
        %690 = vmatpush2.bf16.msra.mxu0 0
        %691 = vmatprep.subr.bf16.mxu0 0
        %692 = vmatpush2.bf16.msra.mxu0 0
        %693 = vmatprep.mubr.bf16.mxu0 0
        %694 = vmatmul.mubr.bf16.gmra.mxu0 %v653
        %v695 = vpop.f32.mrf.mxu0
        %v696 = vadd.f32 0.0, %v695
        %v697 = vpop.f32.mrf.mxu0
        %v698 = vadd.f32 0.0, %v697
        %v699 = vpop.f32.mrf.mxu0
        %v700 = vpop.f32.mrf.mxu0
        %701 = vdwg.mxu0
        %v702 = vadd.f32 %v622, %v696
        %v703 = vadd.f32 %v623, %v698
        %v704 = vld [vmem:[%s227] sm:$0x3f]
        %s705 = scalar_lea.vmem %s0, 24
        %v706 = vld [vmem:[%s705] sm:$0xf]
        %v708 = vcombine.high %v704, %v704
        %v710 = vunpack.c.l.s4 1983009808
        %v711 = vunpack.c.0.s8 %v710
        %v712 = vlaneseq
        %v713 = vshrl.u32 %v712, 7
        %v714 = vsub.s32 %v711, %v713
        %v715 = vrot.slane %v704, %v714
        %v717 = vunpack.c.l.s4 1983009808
        %v718 = vunpack.c.0.s8 %v717
        %v719 = vlaneseq
        %v720 = vshrl.u32 %v719, 7
        %v721 = vsub.s32 %v718, %v720
        %v722 = vrot.slane %v708, %v721
        %v723 = vcombine.high %v715, %v715
        %724 = vrot.lane.b32.xlu0 %v715, 96
        %v725 = vpop.permute.xlu0 %724
        %726 = vrot.lane.b32.xlu0 %v723, 96
        %v727 = vpop.permute.xlu0 %726
        %728 = vrot.lane.b32.xlu0 %v722, 96
        %v729 = vpop.permute.xlu0 %728
        %vm730 = vcmask 785408
        %v731 = vsel %vm730, %v725, %v727
        %v732 = vsel %vm730, %v727, %v729
        %v734 = vsel %vm287, %v706, 0
        %v737 = vsel %vm291, %v731, 0
        %v740 = vsel %vm291, %v732, 0
        %742 = vmatprep.subr.bf16.mxu0 0
        %743 = vmatpush1.bf16.msra.mxu0 0
        %744 = vmatprep.subr.bf16.mxu0 0
        %745 = vmatpush1.bf16.msra.mxu0 0
        %746 = vmatprep.subr.bf16.mxu0 0
        %747 = vmatpush1.bf16.msra.mxu0 0
        %748 = vmatprep.subr.bf16.mxu0 0
        %749 = vmatpush1.bf16.msra.mxu0 0
        %750 = vmatprep.subr.bf16.mxu0 0
        %751 = vmatpush1.bf16.msra.mxu0 0
        %752 = vmatprep.subr.bf16.mxu0 0
        %753 = vmatpush1.bf16.msra.mxu0 0
        %754 = vmatprep.subr.bf16.mxu0 0
        %755 = vmatpush1.bf16.msra.mxu0 0
        %756 = vmatprep.subr.bf16.mxu0 %v740
        %757 = vmatpush1.bf16.msra.mxu0 %v737
        %758 = vmatprep.subr.bf16.mxu0 0
        %759 = vmatpush2.bf16.msra.mxu0 0
        %760 = vmatprep.subr.bf16.mxu0 0
        %761 = vmatpush2.bf16.msra.mxu0 0
        %762 = vmatprep.subr.bf16.mxu0 0
        %763 = vmatpush2.bf16.msra.mxu0 0
        %764 = vmatprep.subr.bf16.mxu0 0
        %765 = vmatpush2.bf16.msra.mxu0 0
        %766 = vmatprep.subr.bf16.mxu0 0
        %767 = vmatpush2.bf16.msra.mxu0 0
        %768 = vmatprep.subr.bf16.mxu0 0
        %769 = vmatpush2.bf16.msra.mxu0 0
        %770 = vmatprep.subr.bf16.mxu0 0
        %771 = vmatpush2.bf16.msra.mxu0 0
        %772 = vmatprep.subr.bf16.mxu0 0
        %773 = vmatpush2.bf16.msra.mxu0 0
        %774 = vmatprep.mubr.bf16.mxu0 0
        %775 = vmatmul.mubr.bf16.gmra.mxu0 %v734
        %v776 = vpop.f32.mrf.mxu0
        %v777 = vadd.f32 0.0, %v776
        %v778 = vpop.f32.mrf.mxu0
        %v779 = vadd.f32 0.0, %v778
        %v780 = vpop.f32.mrf.mxu0
        %v781 = vpop.f32.mrf.mxu0
        %782 = vdwg.mxu0
        %v783 = vadd.f32 %v702, %v777
        %v784 = vadd.f32 %v703, %v779
        %v785 = vld [vmem:[%s274] sm:$0x3f]
        %s786 = scalar_lea.vmem %s0, 28
        %v787 = vld [vmem:[%s786] sm:$0xf]
        %v789 = vcombine.high %v785, %v785
        %v791 = vunpack.c.l.s4 1983009808
        %v792 = vunpack.c.0.s8 %v791
        %v793 = vlaneseq
        %v794 = vshrl.u32 %v793, 7
        %v795 = vsub.s32 %v792, %v794
        %v796 = vrot.slane %v785, %v795
        %v798 = vunpack.c.l.s4 1983009808
        %v799 = vunpack.c.0.s8 %v798
        %v800 = vlaneseq
        %v801 = vshrl.u32 %v800, 7
        %v802 = vsub.s32 %v799, %v801
        %v803 = vrot.slane %v789, %v802
        %v804 = vcombine.high %v796, %v796
        %805 = vrot.lane.b32.xlu0 %v796, 96
        %v806 = vpop.permute.xlu0 %805
        %807 = vrot.lane.b32.xlu0 %v804, 96
        %v808 = vpop.permute.xlu0 %807
        %809 = vrot.lane.b32.xlu0 %v803, 96
        %v810 = vpop.permute.xlu0 %809
        %v811 = vsel %vm730, %v806, %v808
        %v812 = vsel %vm730, %v808, %v810
        %v814 = vsel %vm287, %v787, 0
        %v817 = vsel %vm291, %v811, 0
        %v820 = vsel %vm291, %v812, 0
        %822 = vmatprep.subr.bf16.mxu0 0
        %823 = vmatpush1.bf16.msra.mxu0 0
        %824 = vmatprep.subr.bf16.mxu0 0
        %825 = vmatpush1.bf16.msra.mxu0 0
        %826 = vmatprep.subr.bf16.mxu0 0
        %827 = vmatpush1.bf16.msra.mxu0 0
        %828 = vmatprep.subr.bf16.mxu0 0
        %829 = vmatpush1.bf16.msra.mxu0 0
        %830 = vmatprep.subr.bf16.mxu0 0
        %831 = vmatpush1.bf16.msra.mxu0 0
        %832 = vmatprep.subr.bf16.mxu0 0
        %833 = vmatpush1.bf16.msra.mxu0 0
        %834 = vmatprep.subr.bf16.mxu0 0
        %835 = vmatpush1.bf16.msra.mxu0 0
        %836 = vmatprep.subr.bf16.mxu0 %v820
        %837 = vmatpush1.bf16.msra.mxu0 %v817
        %838 = vmatprep.subr.bf16.mxu0 0
        %839 = vmatpush2.bf16.msra.mxu0 0
        %840 = vmatprep.subr.bf16.mxu0 0
        %841 = vmatpush2.bf16.msra.mxu0 0
        %842 = vmatprep.subr.bf16.mxu0 0
        %843 = vmatpush2.bf16.msra.mxu0 0
        %844 = vmatprep.subr.bf16.mxu0 0
        %845 = vmatpush2.bf16.msra.mxu0 0
        %846 = vmatprep.subr.bf16.mxu0 0
        %847 = vmatpush2.bf16.msra.mxu0 0
        %848 = vmatprep.subr.bf16.mxu0 0
        %849 = vmatpush2.bf16.msra.mxu0 0
        %850 = vmatprep.subr.bf16.mxu0 0
        %851 = vmatpush2.bf16.msra.mxu0 0
        %852 = vmatprep.subr.bf16.mxu0 0
        %853 = vmatpush2.bf16.msra.mxu0 0
        %854 = vmatprep.mubr.bf16.mxu0 0
        %855 = vmatmul.mubr.bf16.gmra.mxu0 %v814
        %v856 = vpop.f32.mrf.mxu0
        %v857 = vadd.f32 0.0, %v856
        %v858 = vpop.f32.mrf.mxu0
        %v859 = vadd.f32 0.0, %v858
        %v860 = vpop.f32.mrf.mxu0
        %v861 = vpop.f32.mrf.mxu0
        %862 = vdwg.mxu0
        %v863 = vadd.f32 %v783, %v857
        %v864 = vadd.f32 %v784, %v859
        %v865 = vld [vmem:[%s398] sm:$0x3f]
        %s866 = scalar_lea.vmem %s0, 32
        %v867 = vld [vmem:[%s866] sm:$0xf]
        %v869 = vcombine.high %v865, %v865
        %v871 = vunpack.c.l.s4 1983009808
        %v872 = vunpack.c.0.s8 %v871
        %v873 = vlaneseq
        %v874 = vshrl.u32 %v873, 7
        %v875 = vsub.s32 %v872, %v874
        %v876 = vrot.slane %v865, %v875
        %v878 = vunpack.c.l.s4 1983009808
        %v879 = vunpack.c.0.s8 %v878
        %v880 = vlaneseq
        %v881 = vshrl.u32 %v880, 7
        %v882 = vsub.s32 %v879, %v881
        %v883 = vrot.slane %v869, %v882
        %v884 = vcombine.high %v876, %v876
        %885 = vrot.lane.b32.xlu0 %v876, 96
        %v886 = vpop.permute.xlu0 %885
        %887 = vrot.lane.b32.xlu0 %v884, 96
        %v888 = vpop.permute.xlu0 %887
        %889 = vrot.lane.b32.xlu0 %v883, 96
        %v890 = vpop.permute.xlu0 %889
        %v891 = vsel %vm730, %v886, %v888
        %v892 = vsel %vm730, %v888, %v890
        %v894 = vsel %vm287, %v867, 0
        %v897 = vsel %vm291, %v891, 0
        %v900 = vsel %vm291, %v892, 0
        %902 = vmatprep.subr.bf16.mxu0 0
        %903 = vmatpush1.bf16.msra.mxu0 0
        %904 = vmatprep.subr.bf16.mxu0 0
        %905 = vmatpush1.bf16.msra.mxu0 0
        %906 = vmatprep.subr.bf16.mxu0 0
        %907 = vmatpush1.bf16.msra.mxu0 0
        %908 = vmatprep.subr.bf16.mxu0 0
        %909 = vmatpush1.bf16.msra.mxu0 0
        %910 = vmatprep.subr.bf16.mxu0 0
        %911 = vmatpush1.bf16.msra.mxu0 0
        %912 = vmatprep.subr.bf16.mxu0 0
        %913 = vmatpush1.bf16.msra.mxu0 0
        %914 = vmatprep.subr.bf16.mxu0 0
        %915 = vmatpush1.bf16.msra.mxu0 0
        %916 = vmatprep.subr.bf16.mxu0 %v900
        %917 = vmatpush1.bf16.msra.mxu0 %v897
        %918 = vmatprep.subr.bf16.mxu0 0
        %919 = vmatpush2.bf16.msra.mxu0 0
        %920 = vmatprep.subr.bf16.mxu0 0
        %921 = vmatpush2.bf16.msra.mxu0 0
        %922 = vmatprep.subr.bf16.mxu0 0
        %923 = vmatpush2.bf16.msra.mxu0 0
        %924 = vmatprep.subr.bf16.mxu0 0
        %925 = vmatpush2.bf16.msra.mxu0 0
        %926 = vmatprep.subr.bf16.mxu0 0
        %927 = vmatpush2.bf16.msra.mxu0 0
        %928 = vmatprep.subr.bf16.mxu0 0
        %929 = vmatpush2.bf16.msra.mxu0 0
        %930 = vmatprep.subr.bf16.mxu0 0
        %931 = vmatpush2.bf16.msra.mxu0 0
        %932 = vmatprep.subr.bf16.mxu0 0
        %933 = vmatpush2.bf16.msra.mxu0 0
        %934 = vmatprep.mubr.bf16.mxu0 0
        %935 = vmatmul.mubr.bf16.gmra.mxu0 %v894
        %v936 = vpop.f32.mrf.mxu0
        %v937 = vadd.f32 0.0, %v936
        %v938 = vpop.f32.mrf.mxu0
        %v939 = vadd.f32 0.0, %v938
        %v940 = vpop.f32.mrf.mxu0
        %v941 = vpop.f32.mrf.mxu0
        %942 = vdwg.mxu0
        %v943 = vadd.f32 %v863, %v937
        %v944 = vadd.f32 %v864, %v939
        %v945 = vpack.c.bf16 %v943, %v943
        %v946 = vpack.c.bf16 %v944, %v944
        %v949 = vunpack.c.l.b16 %v945
        %v950 = vunpack.c.l.b16 %v946
        %v951 = vpack.c.b16 %v950, %v949
        %953 = vst [vmem:[%s262] sm:$0xff] %v951
        %v954 = vadd.f32 %v943, %v944
        %955 = vadd.xlane.f32.xlu0 %v954
        %v956 = vpop.xlane.xlu0 %955
        %vm957 = vcmask 7168
        %958 = vst.msk [vmem:[%s266] sm:$0xff] %vm957, %v956
        %v959 = vmul.f32 %v956, 0.00390625
        %v960 = vsub.f32 %v943, %v959
        %v961 = vsub.f32 %v944, %v959
        %v962 = vmul.f32 %v960, %v960
        %v963 = vmul.f32 %v961, %v961
        %v964 = vadd.f32 %v962, %v963
        %965 = vadd.xlane.f32.xlu0 %v964
        %v966 = vpop.xlane.xlu0 %965
        %967 = vst.msk [vmem:[%s270] sm:$0xff] %vm957, %v966
        %p968 = scmp.lt.s32.totalorder %s16, 1
        %s969 = scalar_select %p968, %s16, 1
        %s970 = smul.addr %s969, 2
        %s971 = smul.addr %s970, 4
        %s972 = scalar_lea.vmem %s2, %s971
        %p973 = scmp.lt.s32.totalorder %s16, 1
        %s974 = scalar_select %p973, %s16, 1
        %s975 = smul.addr %s974, 8
        %s976 = scalar_lea.vmem %s3, %s975
        %p977 = scmp.lt.s32.totalorder %s16, 1
        %s978 = scalar_select %p977, %s16, 1
        %s979 = smul.addr %s978, 8
        %s980 = scalar_lea.vmem %s4, %s979
        // Predicated region
        $region70: #{conv_block_forward.2} parent=64 // pred_check
          %p981 = pneg %p81
        $region71: #{conv_block_forward.2} parent=64 // pred_check_branch
          %983 = sbr.rel (%p981) target = $region73
        $region72: #{conv_block_forward.2} parent=64 // pred_region
          _
        $region73: #{conv_block_forward.2} parent=64 // pred_fallthru
          _
        // Predicated region
        $region74: #{conv_block_forward.2} parent=64 // pred_check
          %p984 = pneg %p107
        $region75: #{conv_block_forward.2} parent=64 // pred_check_branch
          %986 = sbr.rel (%p984) target = $region77
        $region76: #{conv_block_forward.2} parent=64 // pred_region
          _
        $region77: #{conv_block_forward.2} parent=64 // pred_fallthru
          _
        // Predicated region
        $region78: #{conv_block_forward.2} parent=64 // pred_check
          %p987 = pneg %p133
        $region79: #{conv_block_forward.2} parent=64 // pred_check_branch
          %989 = sbr.rel (%p987) target = $region81
        $region80: #{conv_block_forward.2} parent=64 // pred_region
          _
        $region81: #{conv_block_forward.2} parent=64 // pred_fallthru
          _
      $region65: #{conv_block_forward.2} parent=5 // pred_fallthru
        _
      %p990 = scmp.le.s32.totalorder 2, %s11
      // Predicated region
      $region82: #{conv_block_forward.2} parent=5 // pred_check
        %p991 = pneg %p990
      $region83: #{conv_block_forward.2} parent=5 // pred_check_branch
        %993 = sbr.rel (%p991) target = $region85
      $region84: #{conv_block_forward.2} parent=5 // pred_region
        %s994 = ssub.s32 %s11, 2
        // Predicated region
        $region86: #{conv_block_forward.2} parent=84 // pred_check
          %p995 = pneg %p87
        $region87: #{conv_block_forward.2} parent=84 // pred_check_branch
          %997 = sbr.rel (%p995) target = $region89
        $region88: #{conv_block_forward.2} parent=84 // pred_region
          %p998 = scmp.lt.s32.totalorder %s17, 1
          %s999 = scalar_select %p998, %s17, 1
          %s1000 = smul.addr %s999, 2
          %s1001 = smul.addr %s1000, 4
          %s1002 = scalar_lea.vmem %s2, %s1001
        $region89: #{conv_block_forward.2} parent=84 // pred_fallthru
          _
        // Predicated region
        $region90: #{conv_block_forward.2} parent=84 // pred_check
          %p1003 = pneg %p113
        $region91: #{conv_block_forward.2} parent=84 // pred_check_branch
          %1005 = sbr.rel (%p1003) target = $region93
        $region92: #{conv_block_forward.2} parent=84 // pred_region
          %p1006 = scmp.lt.s32.totalorder %s17, 1
          %s1007 = scalar_select %p1006, %s17, 1
          %s1008 = smul.addr %s1007, 8
          %s1009 = scalar_lea.vmem %s3, %s1008
        $region93: #{conv_block_forward.2} parent=84 // pred_fallthru
          _
        // Predicated region
        $region94: #{conv_block_forward.2} parent=84 // pred_check
          %p1010 = pneg %p139
        $region95: #{conv_block_forward.2} parent=84 // pred_check_branch
          %1012 = sbr.rel (%p1010) target = $region97
        $region96: #{conv_block_forward.2} parent=84 // pred_region
          %p1013 = scmp.lt.s32.totalorder %s17, 1
          %s1014 = scalar_select %p1013, %s17, 1
          %s1015 = smul.addr %s1014, 8
          %s1016 = scalar_lea.vmem %s4, %s1015
        $region97: #{conv_block_forward.2} parent=84 // pred_fallthru
          _
      $region85: #{conv_block_forward.2} parent=5 // pred_fallthru
        _
    $region6: #{conv_block_forward.2} parent=1 // loop_footer
      %s15 = sadd.s32 1, %s11
    $region7: #{conv_block_forward.2} parent=1 // loop_footer_branch
      %10 = sbr.rel target = $region3
    $region8: #{conv_block_forward.2} parent=1 // loop_exit
      _

</llo_original>
